<compile_context>
chip_gen: v6e
topology: v6e:2x2x1
jax: 0.10.0
libtpu: 0.0.40
codegen_flags: <defaults>
</compile_context>

<pallas_src>
import functools
import math

import jax
import jax.numpy as jnp
from jax import lax
from jax.experimental import pallas as pl
from jax.experimental.pallas import tpu as pltpu

# ----- hyperparameters (mirror Nequip.__init__), small synthetic sizes -----
NUM_ATOM_TYPES = 4      # num_atom_types
R_MAX = 4.0             # r_max
LMAX = 2                # lmax
NUM_LAYERS = 2          # num_layers
NUM_BASIS = 8           # nequip BesselBasis default
POLY_P = 6.0            # nequip PolynomialCutoff default p
SH_DIM = (LMAX + 1) ** 2
HIDDEN = 16             # hidden channel width
RAD_HIDDEN = 16         # radial-MLP hidden width

N_ATOMS = 8
N_EDGES0 = 8            # edges before the i<->j doubling done in forward()

VMEM_SPEC = pl.BlockSpec(memory_space=pltpu.MemorySpace.VMEM)


# ================= shared math (used by the kernel body AND the autodiff ref) =================
# These functions are called unchanged both inside the Pallas kernel and in the pure-JAX
# reference that the custom_vjp backward differentiates, so forward (Pallas) and backward
# (XLA) always run the same formulas.

def _stable_silu(x):
    """SiLU with an overflow-free sigmoid."""
    e = jnp.exp(-jnp.abs(x))
    sig = jnp.where(x >= 0.0, 1.0 / (1.0 + e), e / (1.0 + e))
    return x * sig


def _stack_lanes(cols):
    """Assemble [E,1] columns into one lane-dense [E,K] value (iota + select;
    lowers cleanly in Mosaic and avoids per-column masked stores)."""
    e = cols[0].shape[0]
    k = len(cols)
    lane = lax.broadcasted_iota(jnp.int32, (e, k), 1)
    out = jnp.zeros((e, k), jnp.float32)
    for i, c in enumerate(cols):
        out = out + jnp.where(lane == i, c, 0.0)
    return out


def _edge_features(edge_vec, *, r_max, num_basis, p):
    """Bessel radial basis * polynomial cutoff and real SH (l<=2) per edge."""
    e = edge_vec.shape[0]
    x = edge_vec[:, 0:1]
    y = edge_vec[:, 1:2]
    z = edge_vec[:, 2:3]
    r = jnp.sqrt(x * x + y * y + z * z)
    r_safe = jnp.maximum(r, 1e-9)
    inv_r = 1.0 / r_safe                      # one reciprocal, reused 4x

    # BesselBasis
    n = lax.broadcasted_iota(jnp.int32, (e, num_basis), 1).astype(jnp.float32) + 1.0
    bessel = math.sqrt(2.0 / r_max) * jnp.sin(n * (math.pi / r_max) * r) * inv_r

    # PolynomialCutoff(p)
    u = r * (1.0 / r_max)
    u2 = u * u
    u4 = u2 * u2
    u6 = u4 * u2
    u7 = u6 * u
    u8 = u6 * u2
    env = (1.0
           - ((p + 1.0) * (p + 2.0) / 2.0) * u6
           + p * (p + 2.0) * u7
           - (p * (p + 1.0) / 2.0) * u8)
    env = jnp.where(u < 1.0, env, 0.0)
    rb = bessel * env                          # [E, num_basis]

    # real spherical harmonics ('component' normalization) of the unit edge vector
    ux = x * inv_r
    uy = y * inv_r
    uz = z * inv_r
    sh = _stack_lanes([
        jnp.ones_like(ux),
        math.sqrt(3.0) * ux,
        math.sqrt(3.0) * uy,
        math.sqrt(3.0) * uz,
        math.sqrt(15.0) * ux * uy,
        math.sqrt(15.0) * uy * uz,
        0.5 * math.sqrt(5.0) * (3.0 * uz * uz - 1.0),
        math.sqrt(15.0) * ux * uz,
        0.5 * math.sqrt(15.0) * (ux * ux - uy * uy),
    ])                                         # [E, 9] single lane-dense value
    return rb, sh


def _dot(a, b):
    # TODO(synk): at realistic sizes cast MXU operands to bf16 (keep f32 accumulation).
    return jnp.dot(a, b, preferred_element_type=jnp.float32)


def _total_energy_math(edge_vec, atom_onehot, gather_send, scatter_recv,
                       w_embed, layer_ws, w_out, *, r_max, num_basis, p):
    """Full NequIP-style forward; returns the [1, 1] total energy.
    `layer_ws` is a list (one entry per ConvNet layer) of dicts of 2-D weights."""
    rb, sh = _edge_features(edge_vec, r_max=r_max, num_basis=num_basis, p=p)
    n_atoms = scatter_recv.shape[0]
    n_edges = scatter_recv.shape[1]
    inv_avg_neighbors = float(n_atoms) / float(n_edges)

    # OneHotAtomEncoding -> node feature embedding
    h = _dot(atom_onehot, w_embed)                               # [N, C]
    c = h.shape[1]

    # ConvNet layers (simplified NequIP interaction block, resnet=True).
    # TODO(synk): the full e3nn Clebsch-Gordan tensor product + gate nonlinearity of
    # ConvNetLayer has no compact Pallas equivalent; replaced with a channel-wise
    # radial*SH-weighted convolution + linear self-connection (same data flow).
    for lw in layer_ws:
        hs = _dot(h, lw["W_linself"])                            # [N, 2C] batched lin+self
        x_lin = hs[:, :c]
        h_self = hs[:, c:]
        x_src = _dot(gather_send, x_lin)                         # [E, C] gather on the MXU
        w_rad = _dot(_stable_silu(_dot(rb, lw["W_rad1"])), lw["W_rad2"])   # [E, C]
        sh_proj = _dot(sh, lw["W_sh"])                           # [E, C]
        msg = _dot(scatter_recv, x_src * w_rad * sh_proj) * inv_avg_neighbors  # [N, C]
        update = _dot(msg, lw["W_msg"]) + h_self
        h = h + _stable_silu(update)                             # resnet

    # AtomwiseLinear -> atomic energy, AtomwiseReduce -> total energy
    atomic_energy = _dot(h, w_out)                               # [N, 1]
    return jnp.sum(atomic_energy, axis=0, keepdims=True)         # [1, 1]


# ================================ fused Pallas kernel ================================

def _energy_kernel(ev_ref, oh_ref, gs_ref, ar_ref,
                   w_embed_ref, w_linself_ref, w_rad1_ref, w_rad2_ref,
                   w_sh_ref, w_msg_ref, w_out_ref, out_ref,
                   *, num_layers, r_max, num_basis, p):
    layer_ws = [
        {"W_linself": w_linself_ref[l], "W_rad1": w_rad1_ref[l],
         "W_rad2": w_rad2_ref[l], "W_sh": w_sh_ref[l], "W_msg": w_msg_ref[l]}
        for l in range(num_layers)
    ]
    out_ref[...] = _total_energy_math(
        ev_ref[...], oh_ref[...], gs_ref[...], ar_ref[...],
        w_embed_ref[...], layer_ws, w_out_ref[...],
        r_max=r_max, num_basis=num_basis, p=p)


def _pallas_total_energy(edge_vec, atom_onehot, gather_send, scatter_recv, params):
    kernel = functools.partial(_energy_kernel, num_layers=NUM_LAYERS,
                               r_max=R_MAX, num_basis=NUM_BASIS, p=POLY_P)
    out = pl.pallas_call(
        kernel,
        out_shape=jax.ShapeDtypeStruct((1, 1), jnp.float32),
        in_specs=[VMEM_SPEC] * 11,
        out_specs=VMEM_SPEC,
        # TODO(synk): for realistic graph sizes add an edge-tile grid axis marked
        # "parallel" (2 TCs on v7x, re-derive tiles for 64 MiB VMEM) and replace the
        # dense one-hot scatter with an index-based scatter via PrefetchScalarGridSpec.
    )(edge_vec, atom_onehot, gather_send, scatter_recv,
      params["W_embed"], params["W_linself"], params["W_rad1"], params["W_rad2"],
      params["W_sh"], params["W_msg"], params["W_out"])
    return out[0, 0]


def _ref_total_energy(edge_vec, atom_onehot, gather_send, scatter_recv, params):
    """Pure-JAX twin of the kernel body (same shared math) used for autodiff."""
    layer_ws = [
        {"W_linself": params["W_linself"][l], "W_rad1": params["W_rad1"][l],
         "W_rad2": params["W_rad2"][l], "W_sh": params["W_sh"][l],
         "W_msg": params["W_msg"][l]}
        for l in range(NUM_LAYERS)
    ]
    out = _total_energy_math(edge_vec, atom_onehot, gather_send, scatter_recv,
                             params["W_embed"], layer_ws, params["W_out"],
                             r_max=R_MAX, num_basis=NUM_BASIS, p=POLY_P)
    return out[0, 0]


@jax.custom_vjp
def fused_energy(edge_vec, atom_onehot, gather_send, scatter_recv, params):
    return _pallas_total_energy(edge_vec, atom_onehot, gather_send, scatter_recv, params)


def _fused_energy_fwd(edge_vec, atom_onehot, gather_send, scatter_recv, params):
    y = _pallas_total_energy(edge_vec, atom_onehot, gather_send, scatter_recv, params)
    return y, (edge_vec, atom_onehot, gather_send, scatter_recv, params)


def _fused_energy_bwd(res, g):
    edge_vec, atom_onehot, gather_send, scatter_recv, params = res
    # TODO(synk): pallas_call has no general autodiff rule; the backward differentiates
    # the pure-JAX twin that runs the *same* shared math as the kernel.  The one-hot
    # gather/scatter matrices and the atom one-hot come from integer indices, so no
    # gradient is computed for them (removes the dead d_adj matmul of the old version).
    def f(ev, p):
        return _ref_total_energy(ev, atom_onehot, gather_send, scatter_recv, p)

    _, vjp = jax.vjp(f, edge_vec, params)
    d_ev, d_params = vjp(g)
    return (d_ev, jnp.zeros_like(atom_onehot), jnp.zeros_like(gather_send),
            jnp.zeros_like(scatter_recv), d_params)


fused_energy.defvjp(_fused_energy_fwd, _fused_energy_bwd)


# ================================ model glue ================================

def init_params(key):
    keys = jax.random.split(key, 2 + 5 * NUM_LAYERS)

    def lin(k, shape):
        return jax.random.normal(k, shape, jnp.float32) / math.sqrt(shape[-2])

    w_linself, w_rad1, w_rad2, w_sh, w_msg = [], [], [], [], []
    idx = 2
    for _ in range(NUM_LAYERS):
        # W_lin and W_self batched into one [C, 2C] weight (one matmul per layer).
        w_linself.append(lin(keys[idx + 0], (HIDDEN, 2 * HIDDEN)))
        w_rad1.append(lin(keys[idx + 1], (NUM_BASIS, RAD_HIDDEN)))
        w_rad2.append(lin(keys[idx + 2], (RAD_HIDDEN, HIDDEN)))
        w_sh.append(lin(keys[idx + 3], (SH_DIM, HIDDEN)))
        w_msg.append(lin(keys[idx + 4], (HIDDEN, HIDDEN)))
        idx += 5

    return {
        "W_embed": lin(keys[0], (NUM_ATOM_TYPES, HIDDEN)),   # OneHotAtomEncoding -> embedding
        "W_out": lin(keys[1], (HIDDEN, 1)),                  # AtomwiseLinear -> atomic energy
        "W_linself": jnp.stack(w_linself),                   # [L, C, 2C]
        "W_rad1": jnp.stack(w_rad1),                         # [L, B, RH]
        "W_rad2": jnp.stack(w_rad2),                         # [L, RH, C]
        "W_sh": jnp.stack(w_sh),                             # [L, 9, C]
        "W_msg": jnp.stack(w_msg),                           # [L, C, C]
    }


def _build_edges(pos, edge_index, cell, cut_off):
    """Edge construction glue (mirrors the PyTorch forward); stays in JAX."""
    vij = pos[edge_index[1]] - pos[edge_index[0]]                 # [E0, 3]
    ecs = (-(vij > cut_off).astype(pos.dtype) * cell
           + (vij < -cut_off).astype(pos.dtype) * cell)           # [E0, 3]
    ei = jnp.concatenate([edge_index, edge_index[::-1]], axis=1)  # [2, 2*E0]
    ecs = jnp.concatenate([ecs, -ecs], axis=0)                    # [E, 3]
    edge_vec = pos[ei[1]] - pos[ei[0]] + ecs                      # [E, 3]
    n_atoms = pos.shape[0]
    gather_send = jax.nn.one_hot(ei[1], n_atoms, dtype=jnp.float32)     # [E, N]
    scatter_recv = jax.nn.one_hot(ei[0], n_atoms, dtype=jnp.float32).T  # [N, E]
    return edge_vec, gather_send, scatter_recv


def nequip_total_energy(pos, params, atom_onehot, edge_index, cell, cut_off):
    edge_vec, gather_send, scatter_recv = _build_edges(pos, edge_index, cell, cut_off)
    return fused_energy(edge_vec, atom_onehot, gather_send, scatter_recv, params)


@jax.jit
def nequip_forward(pos, params, atom_onehot, edge_index, cell, cut_off):
    energy, grad_pos = jax.value_and_grad(nequip_total_energy)(
        pos, params, atom_onehot, edge_index, cell, cut_off)
    force = -grad_pos   # matches torch.autograd.grad([-total_energy], [pos])
    return energy, force


# ================================ main ================================

if __name__ == "__main__":
    key = jax.random.PRNGKey(0)
    k_pos, k_types, k_params = jax.random.split(key, 3)

    pos = jax.random.uniform(k_pos, (N_ATOMS, 3), jnp.float32, 0.0, 5.0)
    atom_types = jax.random.randint(k_types, (N_ATOMS,), 0, NUM_ATOM_TYPES)
    atom_onehot = jax.nn.one_hot(atom_types, NUM_ATOM_TYPES, dtype=jnp.float32)

    src = jnp.arange(N_EDGES0, dtype=jnp.int32)
    dst = (src + 1) % N_ATOMS
    edge_index = jnp.stack([src, dst], axis=0)                    # [2, E0]
    cell = jnp.array([5.0, 5.0, 5.0], jnp.float32)
    cut_off = jnp.asarray(2.5, jnp.float32)

    params = init_params(k_params)

    energy, force = nequip_forward(pos, params, atom_onehot, edge_index, cell, cut_off)
    jax.block_until_ready((energy, force))

    assert energy.shape == ()
    assert force.shape == pos.shape
    assert bool(jnp.all(jnp.isfinite(force)))

    # sanity: fused Pallas forward agrees with the pure-JAX twin used for the backward
    ev, gs, ar = _build_edges(pos, edge_index, cell, cut_off)
    e_ref = _ref_total_energy(ev, atom_onehot, gs, ar, params)
    rel_err = abs(float(energy) - float(e_ref)) / (1.0 + abs(float(e_ref)))
    assert rel_err < 1e-2, f"Pallas/ref energy mismatch: {float(energy)} vs {float(e_ref)}"

    print("KERNEL_OK")
</pallas_src>

<mosaic_0001>
module attributes {stable_mosaic.version = 11 : i64} {
  func.func @_energy_kernel(%arg0: memref<16x3xf32, #tpu.memory_space<vmem>>, %arg1: memref<8x4xf32, #tpu.memory_space<vmem>>, %arg2: memref<16x8xf32, #tpu.memory_space<vmem>>, %arg3: memref<8x16xf32, #tpu.memory_space<vmem>>, %arg4: memref<4x16xf32, #tpu.memory_space<vmem>>, %arg5: memref<2x16x32xf32, #tpu.memory_space<vmem>>, %arg6: memref<2x8x16xf32, #tpu.memory_space<vmem>>, %arg7: memref<2x16x16xf32, #tpu.memory_space<vmem>>, %arg8: memref<2x9x16xf32, #tpu.memory_space<vmem>>, %arg9: memref<2x16x16xf32, #tpu.memory_space<vmem>>, %arg10: memref<16x1xf32, #tpu.memory_space<vmem>>, %arg11: memref<1x1xf32, #tpu.memory_space<vmem>>) attributes {dimension_semantics = [], scalar_prefetch = 0 : i64, scratch_operands = 0 : i64, tpu.core_type = #tpu.core_type<tc>} {
    %c0 = arith.constant 0 : index
    %c0_0 = arith.constant 0 : index
    %c0_1 = arith.constant 0 : index
    %0 = vector.load %arg5[%c0, %c0_0, %c0_1] : memref<2x16x32xf32, #tpu.memory_space<vmem>>, vector<1x16x32xf32>
    %1 = vector.shape_cast %0 : vector<1x16x32xf32> to vector<16x32xf32>
    %c0_2 = arith.constant 0 : index
    %c0_3 = arith.constant 0 : index
    %c0_4 = arith.constant 0 : index
    %2 = vector.load %arg6[%c0_2, %c0_3, %c0_4] : memref<2x8x16xf32, #tpu.memory_space<vmem>>, vector<1x8x16xf32>
    %3 = vector.shape_cast %2 : vector<1x8x16xf32> to vector<8x16xf32>
    %c0_5 = arith.constant 0 : index
    %c0_6 = arith.constant 0 : index
    %c0_7 = arith.constant 0 : index
    %4 = vector.load %arg7[%c0_5, %c0_6, %c0_7] : memref<2x16x16xf32, #tpu.memory_space<vmem>>, vector<1x16x16xf32>
    %5 = vector.shape_cast %4 : vector<1x16x16xf32> to vector<16x16xf32>
    %c0_8 = arith.constant 0 : index
    %c0_9 = arith.constant 0 : index
    %c0_10 = arith.constant 0 : index
    %6 = vector.load %arg8[%c0_8, %c0_9, %c0_10] : memref<2x9x16xf32, #tpu.memory_space<vmem>>, vector<1x9x16xf32>
    %7 = vector.shape_cast %6 : vector<1x9x16xf32> to vector<9x16xf32>
    %c0_11 = arith.constant 0 : index
    %c0_12 = arith.constant 0 : index
    %c0_13 = arith.constant 0 : index
    %8 = vector.load %arg9[%c0_11, %c0_12, %c0_13] : memref<2x16x16xf32, #tpu.memory_space<vmem>>, vector<1x16x16xf32>
    %9 = vector.shape_cast %8 : vector<1x16x16xf32> to vector<16x16xf32>
    %c1 = arith.constant 1 : index
    %c0_14 = arith.constant 0 : index
    %c0_15 = arith.constant 0 : index
    %10 = vector.load %arg5[%c1, %c0_14, %c0_15] : memref<2x16x32xf32, #tpu.memory_space<vmem>>, vector<1x16x32xf32>
    %11 = vector.shape_cast %10 : vector<1x16x32xf32> to vector<16x32xf32>
    %c1_16 = arith.constant 1 : index
    %c0_17 = arith.constant 0 : index
    %c0_18 = arith.constant 0 : index
    %12 = vector.load %arg6[%c1_16, %c0_17, %c0_18] : memref<2x8x16xf32, #tpu.memory_space<vmem>>, vector<1x8x16xf32>
    %13 = vector.shape_cast %12 : vector<1x8x16xf32> to vector<8x16xf32>
    %c1_19 = arith.constant 1 : index
    %c0_20 = arith.constant 0 : index
    %c0_21 = arith.constant 0 : index
    %14 = vector.load %arg7[%c1_19, %c0_20, %c0_21] : memref<2x16x16xf32, #tpu.memory_space<vmem>>, vector<1x16x16xf32>
    %15 = vector.shape_cast %14 : vector<1x16x16xf32> to vector<16x16xf32>
    %c1_22 = arith.constant 1 : index
    %c0_23 = arith.constant 0 : index
    %c0_24 = arith.constant 0 : index
    %16 = vector.load %arg8[%c1_22, %c0_23, %c0_24] : memref<2x9x16xf32, #tpu.memory_space<vmem>>, vector<1x9x16xf32>
    %17 = vector.shape_cast %16 : vector<1x9x16xf32> to vector<9x16xf32>
    %c1_25 = arith.constant 1 : index
    %c0_26 = arith.constant 0 : index
    %c0_27 = arith.constant 0 : index
    %18 = vector.load %arg9[%c1_25, %c0_26, %c0_27] : memref<2x16x16xf32, #tpu.memory_space<vmem>>, vector<1x16x16xf32>
    %19 = vector.shape_cast %18 : vector<1x16x16xf32> to vector<16x16xf32>
    %c0_28 = arith.constant 0 : index
    %c0_29 = arith.constant 0 : index
    %20 = vector.load %arg0[%c0_28, %c0_29] : memref<16x3xf32, #tpu.memory_space<vmem>>, vector<16x3xf32>
    %c0_30 = arith.constant 0 : index
    %c0_31 = arith.constant 0 : index
    %21 = vector.load %arg1[%c0_30, %c0_31] : memref<8x4xf32, #tpu.memory_space<vmem>>, vector<8x4xf32>
    %c0_32 = arith.constant 0 : index
    %c0_33 = arith.constant 0 : index
    %22 = vector.load %arg2[%c0_32, %c0_33] : memref<16x8xf32, #tpu.memory_space<vmem>>, vector<16x8xf32>
    %c0_34 = arith.constant 0 : index
    %c0_35 = arith.constant 0 : index
    %23 = vector.load %arg3[%c0_34, %c0_35] : memref<8x16xf32, #tpu.memory_space<vmem>>, vector<8x16xf32>
    %c0_36 = arith.constant 0 : index
    %c0_37 = arith.constant 0 : index
    %24 = vector.load %arg4[%c0_36, %c0_37] : memref<4x16xf32, #tpu.memory_space<vmem>>, vector<4x16xf32>
    %c0_38 = arith.constant 0 : index
    %c0_39 = arith.constant 0 : index
    %25 = vector.load %arg10[%c0_38, %c0_39] : memref<16x1xf32, #tpu.memory_space<vmem>>, vector<16x1xf32>
    %26 = vector.extract_strided_slice %20 {offsets = [0, 0], sizes = [16, 1], strides = [1, 1]} : vector<16x3xf32> to vector<16x1xf32>
    %27 = vector.extract_strided_slice %20 {offsets = [0, 1], sizes = [16, 1], strides = [1, 1]} : vector<16x3xf32> to vector<16x1xf32>
    %28 = vector.extract_strided_slice %20 {offsets = [0, 2], sizes = [16, 1], strides = [1, 1]} : vector<16x3xf32> to vector<16x1xf32>
    %29 = arith.mulf %26, %26 : vector<16x1xf32>
    %30 = arith.mulf %27, %27 : vector<16x1xf32>
    %31 = arith.addf %29, %30 : vector<16x1xf32>
    %32 = arith.mulf %28, %28 : vector<16x1xf32>
    %33 = arith.addf %31, %32 : vector<16x1xf32>
    %34 = math.sqrt %33 : vector<16x1xf32>
    %cst = arith.constant 9.99999971E-10 : f32
    %35 = vector.broadcast %cst : f32 to vector<16x1xf32>
    %36 = arith.maximumf %34, %35 : vector<16x1xf32>
    %cst_40 = arith.constant 1.000000e+00 : f32
    %37 = vector.broadcast %cst_40 : f32 to vector<16x1xf32>
    %38 = arith.divf %37, %36 : vector<16x1xf32>
    %39 = tpu.iota {dimensions = array<i32: 1>} : vector<16x8xi32>
    %40 = arith.sitofp %39 : vector<16x8xi32> to vector<16x8xf32>
    %cst_41 = arith.constant 1.000000e+00 : f32
    %41 = vector.broadcast %cst_41 : f32 to vector<16x8xf32>
    %42 = arith.addf %40, %41 : vector<16x8xf32>
    %cst_42 = arith.constant 0.785398185 : f32
    %43 = vector.broadcast %cst_42 : f32 to vector<16x8xf32>
    %44 = arith.mulf %42, %43 : vector<16x8xf32>
    %45 = vector.broadcast %34 : vector<16x1xf32> to vector<16x8xf32>
    %46 = arith.mulf %44, %45 : vector<16x8xf32>
    %47 = math.sin %46 : vector<16x8xf32>
    %cst_43 = arith.constant 0.707106769 : f32
    %48 = vector.broadcast %cst_43 : f32 to vector<16x8xf32>
    %49 = arith.mulf %48, %47 : vector<16x8xf32>
    %50 = vector.broadcast %38 : vector<16x1xf32> to vector<16x8xf32>
    %51 = arith.mulf %49, %50 : vector<16x8xf32>
    %cst_44 = arith.constant 2.500000e-01 : f32
    %52 = vector.broadcast %cst_44 : f32 to vector<16x1xf32>
    %53 = arith.mulf %34, %52 : vector<16x1xf32>
    %54 = arith.mulf %53, %53 : vector<16x1xf32>
    %55 = arith.mulf %54, %54 : vector<16x1xf32>
    %56 = arith.mulf %55, %54 : vector<16x1xf32>
    %57 = arith.mulf %56, %53 : vector<16x1xf32>
    %58 = arith.mulf %56, %54 : vector<16x1xf32>
    %cst_45 = arith.constant 2.800000e+01 : f32
    %59 = vector.broadcast %cst_45 : f32 to vector<16x1xf32>
    %60 = arith.mulf %59, %56 : vector<16x1xf32>
    %cst_46 = arith.constant 1.000000e+00 : f32
    %61 = vector.broadcast %cst_46 : f32 to vector<16x1xf32>
    %62 = arith.subf %61, %60 : vector<16x1xf32>
    %cst_47 = arith.constant 4.800000e+01 : f32
    %63 = vector.broadcast %cst_47 : f32 to vector<16x1xf32>
    %64 = arith.mulf %63, %57 : vector<16x1xf32>
    %65 = arith.addf %62, %64 : vector<16x1xf32>
    %cst_48 = arith.constant 2.100000e+01 : f32
    %66 = vector.broadcast %cst_48 : f32 to vector<16x1xf32>
    %67 = arith.mulf %66, %58 : vector<16x1xf32>
    %68 = arith.subf %65, %67 : vector<16x1xf32>
    %cst_49 = arith.constant 1.000000e+00 : f32
    %69 = vector.broadcast %cst_49 : f32 to vector<16x1xf32>
    %70 = arith.cmpf olt, %53, %69 : vector<16x1xf32>
    %cst_50 = arith.constant 0.000000e+00 : f32
    %71 = vector.broadcast %cst_50 : f32 to vector<16x1xf32>
    %72 = arith.select %70, %68, %71 : vector<16x1xi1>, vector<16x1xf32>
    %73 = vector.broadcast %72 : vector<16x1xf32> to vector<16x8xf32>
    %74 = arith.mulf %51, %73 : vector<16x8xf32>
    %75 = arith.mulf %26, %38 : vector<16x1xf32>
    %76 = arith.mulf %27, %38 : vector<16x1xf32>
    %77 = arith.mulf %28, %38 : vector<16x1xf32>
    %cst_51 = arith.constant 1.000000e+00 : f32
    %78 = vector.broadcast %cst_51 : f32 to vector<16x1xf32>
    %cst_52 = arith.constant 1.73205078 : f32
    %79 = vector.broadcast %cst_52 : f32 to vector<16x1xf32>
    %80 = arith.mulf %79, %75 : vector<16x1xf32>
    %cst_53 = arith.constant 1.73205078 : f32
    %81 = vector.broadcast %cst_53 : f32 to vector<16x1xf32>
    %82 = arith.mulf %81, %76 : vector<16x1xf32>
    %cst_54 = arith.constant 1.73205078 : f32
    %83 = vector.broadcast %cst_54 : f32 to vector<16x1xf32>
    %84 = arith.mulf %83, %77 : vector<16x1xf32>
    %cst_55 = arith.constant 3.87298346 : f32
    %85 = vector.broadcast %cst_55 : f32 to vector<16x1xf32>
    %86 = arith.mulf %85, %75 : vector<16x1xf32>
    %87 = arith.mulf %86, %76 : vector<16x1xf32>
    %cst_56 = arith.constant 3.87298346 : f32
    %88 = vector.broadcast %cst_56 : f32 to vector<16x1xf32>
    %89 = arith.mulf %88, %76 : vector<16x1xf32>
    %90 = arith.mulf %89, %77 : vector<16x1xf32>
    %cst_57 = arith.constant 3.000000e+00 : f32
    %91 = vector.broadcast %cst_57 : f32 to vector<16x1xf32>
    %92 = arith.mulf %91, %77 : vector<16x1xf32>
    %93 = arith.mulf %92, %77 : vector<16x1xf32>
    %cst_58 = arith.constant 1.000000e+00 : f32
    %94 = vector.broadcast %cst_58 : f32 to vector<16x1xf32>
    %95 = arith.subf %93, %94 : vector<16x1xf32>
    %cst_59 = arith.constant 1.11803401 : f32
    %96 = vector.broadcast %cst_59 : f32 to vector<16x1xf32>
    %97 = arith.mulf %96, %95 : vector<16x1xf32>
    %cst_60 = arith.constant 3.87298346 : f32
    %98 = vector.broadcast %cst_60 : f32 to vector<16x1xf32>
    %99 = arith.mulf %98, %75 : vector<16x1xf32>
    %100 = arith.mulf %99, %77 : vector<16x1xf32>
    %101 = arith.mulf %75, %75 : vector<16x1xf32>
    %102 = arith.mulf %76, %76 : vector<16x1xf32>
    %103 = arith.subf %101, %102 : vector<16x1xf32>
    %cst_61 = arith.constant 1.93649173 : f32
    %104 = vector.broadcast %cst_61 : f32 to vector<16x1xf32>
    %105 = arith.mulf %104, %103 : vector<16x1xf32>
    %106 = tpu.iota {dimensions = array<i32: 1>} : vector<16x9xi32>
    %cst_62 = arith.constant 0.000000e+00 : f32
    %107 = vector.broadcast %cst_62 : f32 to vector<16x9xf32>
    %c0_i32 = arith.constant 0 : i32
    %108 = vector.broadcast %c0_i32 : i32 to vector<16x9xi32>
    %109 = arith.cmpi eq, %106, %108 : vector<16x9xi32>
    %cst_63 = arith.constant 0.000000e+00 : f32
    %110 = vector.shape_cast %78 : vector<16x1xf32> to vector<16x1xf32>
    %111 = vector.broadcast %110 : vector<16x1xf32> to vector<16x9xf32>
    %112 = vector.broadcast %cst_63 : f32 to vector<16x9xf32>
    %113 = arith.select %109, %111, %112 : vector<16x9xi1>, vector<16x9xf32>
    %114 = arith.addf %107, %113 : vector<16x9xf32>
    %c1_i32 = arith.constant 1 : i32
    %115 = vector.broadcast %c1_i32 : i32 to vector<16x9xi32>
    %116 = arith.cmpi eq, %106, %115 : vector<16x9xi32>
    %cst_64 = arith.constant 0.000000e+00 : f32
    %117 = vector.shape_cast %80 : vector<16x1xf32> to vector<16x1xf32>
    %118 = vector.broadcast %117 : vector<16x1xf32> to vector<16x9xf32>
    %119 = vector.broadcast %cst_64 : f32 to vector<16x9xf32>
    %120 = arith.select %116, %118, %119 : vector<16x9xi1>, vector<16x9xf32>
    %121 = arith.addf %114, %120 : vector<16x9xf32>
    %c2_i32 = arith.constant 2 : i32
    %122 = vector.broadcast %c2_i32 : i32 to vector<16x9xi32>
    %123 = arith.cmpi eq, %106, %122 : vector<16x9xi32>
    %cst_65 = arith.constant 0.000000e+00 : f32
    %124 = vector.shape_cast %82 : vector<16x1xf32> to vector<16x1xf32>
    %125 = vector.broadcast %124 : vector<16x1xf32> to vector<16x9xf32>
    %126 = vector.broadcast %cst_65 : f32 to vector<16x9xf32>
    %127 = arith.select %123, %125, %126 : vector<16x9xi1>, vector<16x9xf32>
    %128 = arith.addf %121, %127 : vector<16x9xf32>
    %c3_i32 = arith.constant 3 : i32
    %129 = vector.broadcast %c3_i32 : i32 to vector<16x9xi32>
    %130 = arith.cmpi eq, %106, %129 : vector<16x9xi32>
    %cst_66 = arith.constant 0.000000e+00 : f32
    %131 = vector.shape_cast %84 : vector<16x1xf32> to vector<16x1xf32>
    %132 = vector.broadcast %131 : vector<16x1xf32> to vector<16x9xf32>
    %133 = vector.broadcast %cst_66 : f32 to vector<16x9xf32>
    %134 = arith.select %130, %132, %133 : vector<16x9xi1>, vector<16x9xf32>
    %135 = arith.addf %128, %134 : vector<16x9xf32>
    %c4_i32 = arith.constant 4 : i32
    %136 = vector.broadcast %c4_i32 : i32 to vector<16x9xi32>
    %137 = arith.cmpi eq, %106, %136 : vector<16x9xi32>
    %cst_67 = arith.constant 0.000000e+00 : f32
    %138 = vector.shape_cast %87 : vector<16x1xf32> to vector<16x1xf32>
    %139 = vector.broadcast %138 : vector<16x1xf32> to vector<16x9xf32>
    %140 = vector.broadcast %cst_67 : f32 to vector<16x9xf32>
    %141 = arith.select %137, %139, %140 : vector<16x9xi1>, vector<16x9xf32>
    %142 = arith.addf %135, %141 : vector<16x9xf32>
    %c5_i32 = arith.constant 5 : i32
    %143 = vector.broadcast %c5_i32 : i32 to vector<16x9xi32>
    %144 = arith.cmpi eq, %106, %143 : vector<16x9xi32>
    %cst_68 = arith.constant 0.000000e+00 : f32
    %145 = vector.shape_cast %90 : vector<16x1xf32> to vector<16x1xf32>
    %146 = vector.broadcast %145 : vector<16x1xf32> to vector<16x9xf32>
    %147 = vector.broadcast %cst_68 : f32 to vector<16x9xf32>
    %148 = arith.select %144, %146, %147 : vector<16x9xi1>, vector<16x9xf32>
    %149 = arith.addf %142, %148 : vector<16x9xf32>
    %c6_i32 = arith.constant 6 : i32
    %150 = vector.broadcast %c6_i32 : i32 to vector<16x9xi32>
    %151 = arith.cmpi eq, %106, %150 : vector<16x9xi32>
    %cst_69 = arith.constant 0.000000e+00 : f32
    %152 = vector.shape_cast %97 : vector<16x1xf32> to vector<16x1xf32>
    %153 = vector.broadcast %152 : vector<16x1xf32> to vector<16x9xf32>
    %154 = vector.broadcast %cst_69 : f32 to vector<16x9xf32>
    %155 = arith.select %151, %153, %154 : vector<16x9xi1>, vector<16x9xf32>
    %156 = arith.addf %149, %155 : vector<16x9xf32>
    %c7_i32 = arith.constant 7 : i32
    %157 = vector.broadcast %c7_i32 : i32 to vector<16x9xi32>
    %158 = arith.cmpi eq, %106, %157 : vector<16x9xi32>
    %cst_70 = arith.constant 0.000000e+00 : f32
    %159 = vector.shape_cast %100 : vector<16x1xf32> to vector<16x1xf32>
    %160 = vector.broadcast %159 : vector<16x1xf32> to vector<16x9xf32>
    %161 = vector.broadcast %cst_70 : f32 to vector<16x9xf32>
    %162 = arith.select %158, %160, %161 : vector<16x9xi1>, vector<16x9xf32>
    %163 = arith.addf %156, %162 : vector<16x9xf32>
    %c8_i32 = arith.constant 8 : i32
    %164 = vector.broadcast %c8_i32 : i32 to vector<16x9xi32>
    %165 = arith.cmpi eq, %106, %164 : vector<16x9xi32>
    %cst_71 = arith.constant 0.000000e+00 : f32
    %166 = vector.shape_cast %105 : vector<16x1xf32> to vector<16x1xf32>
    %167 = vector.broadcast %166 : vector<16x1xf32> to vector<16x9xf32>
    %168 = vector.broadcast %cst_71 : f32 to vector<16x9xf32>
    %169 = arith.select %165, %167, %168 : vector<16x9xi1>, vector<16x9xf32>
    %170 = arith.addf %163, %169 : vector<16x9xf32>
    %cst_72 = arith.constant dense<0.000000e+00> : vector<8x16xf32>
    %171 = tpu.matmul %21, %24, %cst_72 {dimension_numbers = #tpu.dot_dimension_numbers<[1], [0], [0], [1], [0, 0, 1, 1], [], []>} : vector<8x4xf32>, vector<4x16xf32>, vector<8x16xf32> -> vector<8x16xf32>
    %cst_73 = arith.constant dense<0.000000e+00> : vector<8x32xf32>
    %172 = tpu.matmul %171, %1, %cst_73 {dimension_numbers = #tpu.dot_dimension_numbers<[1], [0], [0], [1], [0, 0, 1, 1], [], []>} : vector<8x16xf32>, vector<16x32xf32>, vector<8x32xf32> -> vector<8x32xf32>
    %173 = vector.extract_strided_slice %172 {offsets = [0, 0], sizes = [8, 16], strides = [1, 1]} : vector<8x32xf32> to vector<8x16xf32>
    %174 = vector.extract_strided_slice %172 {offsets = [0, 16], sizes = [8, 16], strides = [1, 1]} : vector<8x32xf32> to vector<8x16xf32>
    %cst_74 = arith.constant dense<0.000000e+00> : vector<16x16xf32>
    %175 = tpu.matmul %22, %173, %cst_74 {dimension_numbers = #tpu.dot_dimension_numbers<[1], [0], [0], [1], [0, 0, 1, 1], [], []>} : vector<16x8xf32>, vector<8x16xf32>, vector<16x16xf32> -> vector<16x16xf32>
    %cst_75 = arith.constant dense<0.000000e+00> : vector<16x16xf32>
    %176 = tpu.matmul %74, %3, %cst_75 {dimension_numbers = #tpu.dot_dimension_numbers<[1], [0], [0], [1], [0, 0, 1, 1], [], []>} : vector<16x8xf32>, vector<8x16xf32>, vector<16x16xf32> -> vector<16x16xf32>
    %177 = math.absf %176 : vector<16x16xf32>
    %cst_76 = arith.constant 0.000000e+00 : f32
    %178 = vector.broadcast %cst_76 : f32 to vector<16x16xf32>
    %179 = arith.subf %178, %177 : vector<16x16xf32>
    %180 = math.exp %179 : vector<16x16xf32>
    %cst_77 = arith.constant 0.000000e+00 : f32
    %181 = vector.broadcast %cst_77 : f32 to vector<16x16xf32>
    %182 = arith.cmpf oge, %176, %181 : vector<16x16xf32>
    %cst_78 = arith.constant 1.000000e+00 : f32
    %183 = vector.broadcast %cst_78 : f32 to vector<16x16xf32>
    %184 = arith.addf %183, %180 : vector<16x16xf32>
    %cst_79 = arith.constant 1.000000e+00 : f32
    %185 = vector.broadcast %cst_79 : f32 to vector<16x16xf32>
    %186 = arith.divf %185, %184 : vector<16x16xf32>
    %cst_80 = arith.constant 1.000000e+00 : f32
    %187 = vector.broadcast %cst_80 : f32 to vector<16x16xf32>
    %188 = arith.addf %187, %180 : vector<16x16xf32>
    %189 = arith.divf %180, %188 : vector<16x16xf32>
    %190 = arith.select %182, %186, %189 : vector<16x16xi1>, vector<16x16xf32>
    %191 = arith.mulf %176, %190 : vector<16x16xf32>
    %cst_81 = arith.constant dense<0.000000e+00> : vector<16x16xf32>
    %192 = tpu.matmul %191, %5, %cst_81 {dimension_numbers = #tpu.dot_dimension_numbers<[1], [0], [0], [1], [0, 0, 1, 1], [], []>} : vector<16x16xf32>, vector<16x16xf32>, vector<16x16xf32> -> vector<16x16xf32>
    %cst_82 = arith.constant dense<0.000000e+00> : vector<16x16xf32>
    %193 = tpu.matmul %170, %7, %cst_82 {dimension_numbers = #tpu.dot_dimension_numbers<[1], [0], [0], [1], [0, 0, 1, 1], [], []>} : vector<16x9xf32>, vector<9x16xf32>, vector<16x16xf32> -> vector<16x16xf32>
    %194 = arith.mulf %175, %192 : vector<16x16xf32>
    %195 = arith.mulf %194, %193 : vector<16x16xf32>
    %cst_83 = arith.constant dense<0.000000e+00> : vector<8x16xf32>
    %196 = tpu.matmul %23, %195, %cst_83 {dimension_numbers = #tpu.dot_dimension_numbers<[1], [0], [0], [1], [0, 0, 1, 1], [], []>} : vector<8x16xf32>, vector<16x16xf32>, vector<8x16xf32> -> vector<8x16xf32>
    %cst_84 = arith.constant 5.000000e-01 : f32
    %197 = vector.broadcast %cst_84 : f32 to vector<8x16xf32>
    %198 = arith.mulf %196, %197 : vector<8x16xf32>
    %cst_85 = arith.constant dense<0.000000e+00> : vector<8x16xf32>
    %199 = tpu.matmul %198, %9, %cst_85 {dimension_numbers = #tpu.dot_dimension_numbers<[1], [0], [0], [1], [0, 0, 1, 1], [], []>} : vector<8x16xf32>, vector<16x16xf32>, vector<8x16xf32> -> vector<8x16xf32>
    %200 = arith.addf %199, %174 : vector<8x16xf32>
    %201 = math.absf %200 : vector<8x16xf32>
    %cst_86 = arith.constant 0.000000e+00 : f32
    %202 = vector.broadcast %cst_86 : f32 to vector<8x16xf32>
    %203 = arith.subf %202, %201 : vector<8x16xf32>
    %204 = math.exp %203 : vector<8x16xf32>
    %cst_87 = arith.constant 0.000000e+00 : f32
    %205 = vector.broadcast %cst_87 : f32 to vector<8x16xf32>
    %206 = arith.cmpf oge, %200, %205 : vector<8x16xf32>
    %cst_88 = arith.constant 1.000000e+00 : f32
    %207 = vector.broadcast %cst_88 : f32 to vector<8x16xf32>
    %208 = arith.addf %207, %204 : vector<8x16xf32>
    %cst_89 = arith.constant 1.000000e+00 : f32
    %209 = vector.broadcast %cst_89 : f32 to vector<8x16xf32>
    %210 = arith.divf %209, %208 : vector<8x16xf32>
    %cst_90 = arith.constant 1.000000e+00 : f32
    %211 = vector.broadcast %cst_90 : f32 to vector<8x16xf32>
    %212 = arith.addf %211, %204 : vector<8x16xf32>
    %213 = arith.divf %204, %212 : vector<8x16xf32>
    %214 = arith.select %206, %210, %213 : vector<8x16xi1>, vector<8x16xf32>
    %215 = arith.mulf %200, %214 : vector<8x16xf32>
    %216 = arith.addf %171, %215 : vector<8x16xf32>
    %cst_91 = arith.constant dense<0.000000e+00> : vector<8x32xf32>
    %217 = tpu.matmul %216, %11, %cst_91 {dimension_numbers = #tpu.dot_dimension_numbers<[1], [0], [0], [1], [0, 0, 1, 1], [], []>} : vector<8x16xf32>, vector<16x32xf32>, vector<8x32xf32> -> vector<8x32xf32>
    %218 = vector.extract_strided_slice %217 {offsets = [0, 0], sizes = [8, 16], strides = [1, 1]} : vector<8x32xf32> to vector<8x16xf32>
    %219 = vector.extract_strided_slice %217 {offsets = [0, 16], sizes = [8, 16], strides = [1, 1]} : vector<8x32xf32> to vector<8x16xf32>
    %cst_92 = arith.constant dense<0.000000e+00> : vector<16x16xf32>
    %220 = tpu.matmul %22, %218, %cst_92 {dimension_numbers = #tpu.dot_dimension_numbers<[1], [0], [0], [1], [0, 0, 1, 1], [], []>} : vector<16x8xf32>, vector<8x16xf32>, vector<16x16xf32> -> vector<16x16xf32>
    %cst_93 = arith.constant dense<0.000000e+00> : vector<16x16xf32>
    %221 = tpu.matmul %74, %13, %cst_93 {dimension_numbers = #tpu.dot_dimension_numbers<[1], [0], [0], [1], [0, 0, 1, 1], [], []>} : vector<16x8xf32>, vector<8x16xf32>, vector<16x16xf32> -> vector<16x16xf32>
    %222 = math.absf %221 : vector<16x16xf32>
    %cst_94 = arith.constant 0.000000e+00 : f32
    %223 = vector.broadcast %cst_94 : f32 to vector<16x16xf32>
    %224 = arith.subf %223, %222 : vector<16x16xf32>
    %225 = math.exp %224 : vector<16x16xf32>
    %cst_95 = arith.constant 0.000000e+00 : f32
    %226 = vector.broadcast %cst_95 : f32 to vector<16x16xf32>
    %227 = arith.cmpf oge, %221, %226 : vector<16x16xf32>
    %cst_96 = arith.constant 1.000000e+00 : f32
    %228 = vector.broadcast %cst_96 : f32 to vector<16x16xf32>
    %229 = arith.addf %228, %225 : vector<16x16xf32>
    %cst_97 = arith.constant 1.000000e+00 : f32
    %230 = vector.broadcast %cst_97 : f32 to vector<16x16xf32>
    %231 = arith.divf %230, %229 : vector<16x16xf32>
    %cst_98 = arith.constant 1.000000e+00 : f32
    %232 = vector.broadcast %cst_98 : f32 to vector<16x16xf32>
    %233 = arith.addf %232, %225 : vector<16x16xf32>
    %234 = arith.divf %225, %233 : vector<16x16xf32>
    %235 = arith.select %227, %231, %234 : vector<16x16xi1>, vector<16x16xf32>
    %236 = arith.mulf %221, %235 : vector<16x16xf32>
    %cst_99 = arith.constant dense<0.000000e+00> : vector<16x16xf32>
    %237 = tpu.matmul %236, %15, %cst_99 {dimension_numbers = #tpu.dot_dimension_numbers<[1], [0], [0], [1], [0, 0, 1, 1], [], []>} : vector<16x16xf32>, vector<16x16xf32>, vector<16x16xf32> -> vector<16x16xf32>
    %cst_100 = arith.constant dense<0.000000e+00> : vector<16x16xf32>
    %238 = tpu.matmul %170, %17, %cst_100 {dimension_numbers = #tpu.dot_dimension_numbers<[1], [0], [0], [1], [0, 0, 1, 1], [], []>} : vector<16x9xf32>, vector<9x16xf32>, vector<16x16xf32> -> vector<16x16xf32>
    %239 = arith.mulf %220, %237 : vector<16x16xf32>
    %240 = arith.mulf %239, %238 : vector<16x16xf32>
    %cst_101 = arith.constant dense<0.000000e+00> : vector<8x16xf32>
    %241 = tpu.matmul %23, %240, %cst_101 {dimension_numbers = #tpu.dot_dimension_numbers<[1], [0], [0], [1], [0, 0, 1, 1], [], []>} : vector<8x16xf32>, vector<16x16xf32>, vector<8x16xf32> -> vector<8x16xf32>
    %cst_102 = arith.constant 5.000000e-01 : f32
    %242 = vector.broadcast %cst_102 : f32 to vector<8x16xf32>
    %243 = arith.mulf %241, %242 : vector<8x16xf32>
    %cst_103 = arith.constant dense<0.000000e+00> : vector<8x16xf32>
    %244 = tpu.matmul %243, %19, %cst_103 {dimension_numbers = #tpu.dot_dimension_numbers<[1], [0], [0], [1], [0, 0, 1, 1], [], []>} : vector<8x16xf32>, vector<16x16xf32>, vector<8x16xf32> -> vector<8x16xf32>
    %245 = arith.addf %244, %219 : vector<8x16xf32>
    %246 = math.absf %245 : vector<8x16xf32>
    %cst_104 = arith.constant 0.000000e+00 : f32
    %247 = vector.broadcast %cst_104 : f32 to vector<8x16xf32>
    %248 = arith.subf %247, %246 : vector<8x16xf32>
    %249 = math.exp %248 : vector<8x16xf32>
    %cst_105 = arith.constant 0.000000e+00 : f32
    %250 = vector.broadcast %cst_105 : f32 to vector<8x16xf32>
    %251 = arith.cmpf oge, %245, %250 : vector<8x16xf32>
    %cst_106 = arith.constant 1.000000e+00 : f32
    %252 = vector.broadcast %cst_106 : f32 to vector<8x16xf32>
    %253 = arith.addf %252, %249 : vector<8x16xf32>
    %cst_107 = arith.constant 1.000000e+00 : f32
    %254 = vector.broadcast %cst_107 : f32 to vector<8x16xf32>
    %255 = arith.divf %254, %253 : vector<8x16xf32>
    %cst_108 = arith.constant 1.000000e+00 : f32
    %256 = vector.broadcast %cst_108 : f32 to vector<8x16xf32>
    %257 = arith.addf %256, %249 : vector<8x16xf32>
    %258 = arith.divf %249, %257 : vector<8x16xf32>
    %259 = arith.select %251, %255, %258 : vector<8x16xi1>, vector<8x16xf32>
    %260 = arith.mulf %245, %259 : vector<8x16xf32>
    %261 = arith.addf %216, %260 : vector<8x16xf32>
    %cst_109 = arith.constant dense<0.000000e+00> : vector<8x1xf32>
    %262 = tpu.matmul %261, %25, %cst_109 {dimension_numbers = #tpu.dot_dimension_numbers<[1], [0], [0], [1], [0, 0, 1, 1], [], []>} : vector<8x16xf32>, vector<16x1xf32>, vector<8x1xf32> -> vector<8x1xf32>
    %cst_110 = arith.constant dense<0.000000e+00> : vector<1xf32>
    %263 = vector.multi_reduction <add>, %262, %cst_110 [0] : vector<8x1xf32> to vector<1xf32>
    %264 = vector.shape_cast %263 : vector<1xf32> to vector<1x1xf32>
    %c0_111 = arith.constant 0 : index
    %c0_112 = arith.constant 0 : index
    %265 = vector.load %arg11[%c0_111, %c0_112] : memref<1x1xf32, #tpu.memory_space<vmem>>, vector<1x1xf32>
    tpu.vector_store %arg11[%c0_111, %c0_112], %264 {strides = array<i32>} : memref<1x1xf32, #tpu.memory_space<vmem>>, vector<1x1xf32>,
    return
  }
}

</mosaic_0001>

<llo_original>
// kernel: jvp__.1
$region0: #{jvp__.1}
  #allocation0 [shape = 'u32[]', space=smem, size = 0x4, offset = 0x4, fixed_abs, tag = 'smem constant byte address 0x4 - core index']
  #allocation1 [shape = 'u32[144,128]{1,0:T(1,128)}', space=vmem, size = 0x12000, scoped, tag = 'internal scratch']
  %s0 = inlined_call_operand.vmem [shape: f32[16,3], index: 0, kind: input, shape index: {}]
  %s1 = inlined_call_operand.vmem [shape: f32[8,4], index: 1, kind: input, shape index: {}]
  %s2 = inlined_call_operand.vmem [shape: f32[16,8], index: 2, kind: input, shape index: {}]
  %s3 = inlined_call_operand.vmem [shape: f32[8,16], index: 3, kind: input, shape index: {}]
  %s4 = inlined_call_operand.vmem [shape: f32[4,16], index: 4, kind: input, shape index: {}]
  %s5 = inlined_call_operand.vmem [shape: f32[2,16,32], index: 5, kind: input, shape index: {}]
  %s6 = inlined_call_operand.vmem [shape: f32[2,8,16], index: 6, kind: input, shape index: {}]
  %s7 = inlined_call_operand.vmem [shape: f32[2,16,16], index: 7, kind: input, shape index: {}]
  %s8 = inlined_call_operand.vmem [shape: f32[2,9,16], index: 8, kind: input, shape index: {}]
  %s9 = inlined_call_operand.vmem [shape: f32[2,16,16], index: 9, kind: input, shape index: {}]
  %s10 = inlined_call_operand.vmem [shape: f32[16,1], index: 10, kind: input, shape index: {}]
  %s11 = inlined_call_operand.hbm [shape: f32[1,1], index: 11, kind: output, shape index: {}]
  %s12 = sld [smem:[#allocation0]]
  $region54: #{jvp__.1} parent=0
    _
  %s14 = ssub.s32 1, %s12
  %s15 = scalar_select 0, %s14, %s12
  $region1: #{jvp__.1} parent=0
    #allocation2 [shape = 'u8[512]{0}', space=vmem, size = 0x400, scoped, tag = 'output window, operand 0, single buffered']
    #allocation3 [shape = 's32[1]{0}', space=sflag, size = 0x4, scoped, tag = 'scoped memory for jvp__.1']
    %16 = vsyncpa [#allocation3], 0
    // Predicated region
    $region2: #{jvp__.1} parent=1 // pred_check
      _
    $region3: #{jvp__.1} parent=1 // pred_check_branch
      %18 = sbr.rel (0) target = $region5
    $region4: #{jvp__.1} parent=1 // pred_region
      _
    $region5: #{jvp__.1} parent=1 // pred_fallthru
      _
    // Predicated region
    $region6: #{jvp__.1} parent=1 // pred_check
      _
    $region7: #{jvp__.1} parent=1 // pred_check_branch
      %20 = sbr.rel (0) target = $region9
    $region8: #{jvp__.1} parent=1 // pred_region
      _
    $region9: #{jvp__.1} parent=1 // pred_fallthru
      _
    // Predicated region
    $region10: #{jvp__.1} parent=1 // pred_check
      _
    $region11: #{jvp__.1} parent=1 // pred_check_branch
      %22 = sbr.rel (0) target = $region13
    $region12: #{jvp__.1} parent=1 // pred_region
      _
    $region13: #{jvp__.1} parent=1 // pred_fallthru
      _
    // Predicated region
    $region14: #{jvp__.1} parent=1 // pred_check
      _
    $region15: #{jvp__.1} parent=1 // pred_check_branch
      %24 = sbr.rel (0) target = $region17
    $region16: #{jvp__.1} parent=1 // pred_region
      _
    $region17: #{jvp__.1} parent=1 // pred_fallthru
      _
    // Predicated region
    $region18: #{jvp__.1} parent=1 // pred_check
      _
    $region19: #{jvp__.1} parent=1 // pred_check_branch
      %26 = sbr.rel (0) target = $region21
    $region20: #{jvp__.1} parent=1 // pred_region
      _
    $region21: #{jvp__.1} parent=1 // pred_fallthru
      _
    // Predicated region
    $region22: #{jvp__.1} parent=1 // pred_check
      _
    $region23: #{jvp__.1} parent=1 // pred_check_branch
      %28 = sbr.rel (0) target = $region25
    $region24: #{jvp__.1} parent=1 // pred_region
      _
    $region25: #{jvp__.1} parent=1 // pred_fallthru
      _
    // Predicated region
    $region26: #{jvp__.1} parent=1 // pred_check
      _
    $region27: #{jvp__.1} parent=1 // pred_check_branch
      %30 = sbr.rel (0) target = $region29
    $region28: #{jvp__.1} parent=1 // pred_region
      _
    $region29: #{jvp__.1} parent=1 // pred_fallthru
      _
    // Predicated region
    $region30: #{jvp__.1} parent=1 // pred_check
      _
    $region31: #{jvp__.1} parent=1 // pred_check_branch
      %32 = sbr.rel (0) target = $region33
    $region32: #{jvp__.1} parent=1 // pred_region
      _
    $region33: #{jvp__.1} parent=1 // pred_fallthru
      _
    // Predicated region
    $region34: #{jvp__.1} parent=1 // pred_check
      _
    $region35: #{jvp__.1} parent=1 // pred_check_branch
      %34 = sbr.rel (0) target = $region37
    $region36: #{jvp__.1} parent=1 // pred_region
      _
    $region37: #{jvp__.1} parent=1 // pred_fallthru
      _
    // Predicated region
    $region38: #{jvp__.1} parent=1 // pred_check
      _
    $region39: #{jvp__.1} parent=1 // pred_check_branch
      %36 = sbr.rel (0) target = $region41
    $region40: #{jvp__.1} parent=1 // pred_region
      _
    $region41: #{jvp__.1} parent=1 // pred_fallthru
      _
    // Predicated region
    $region42: #{jvp__.1} parent=1 // pred_check
      _
    $region43: #{jvp__.1} parent=1 // pred_check_branch
      %38 = sbr.rel (0) target = $region45
    $region44: #{jvp__.1} parent=1 // pred_region
      _
    $region45: #{jvp__.1} parent=1 // pred_fallthru
      _
    %v39 = vld [vmem:[%s5] sm:$0xff]
    %v40 = vld [vmem:[%s5 + $0x8] sm:$0xff]
    %v41 = vld [vmem:[%s6] sm:$0xff]
    %v42 = vld [vmem:[%s7] sm:$0xff]
    %v43 = vld [vmem:[%s7 + $0x8] sm:$0xff]
    %v44 = vld [vmem:[%s8] sm:$0xff]
    %v45 = vld [vmem:[%s8 + $0x8] sm:$0x1]
    %v46 = vld [vmem:[%s9] sm:$0xff]
    %v47 = vld [vmem:[%s9 + $0x8] sm:$0xff]
    %s48 = scalar_lea.vmem %s5, 16
    %v49 = vld [vmem:[%s48] sm:$0xff]
    %v50 = vld [vmem:[%s48 + $0x8] sm:$0xff]
    %s51 = scalar_lea.vmem %s6, 8
    %v52 = vld [vmem:[%s51] sm:$0xff]
    %s53 = scalar_lea.vmem %s7, 16
    %v54 = vld [vmem:[%s53] sm:$0xff]
    %v55 = vld [vmem:[%s53 + $0x8] sm:$0xff]
    %s56 = scalar_lea.vmem %s8, 16
    %v57 = vld [vmem:[%s56] sm:$0xff]
    %v58 = vld [vmem:[%s56 + $0x8] sm:$0x1]
    %s59 = scalar_lea.vmem %s9, 16
    %v60 = vld [vmem:[%s59] sm:$0xff]
    %v61 = vld [vmem:[%s59 + $0x8] sm:$0xff]
    %v62 = vld [vmem:[%s0] sm:$0xff]
    %v63 = vld [vmem:[%s0 + $0x8] sm:$0xff]
    %v64 = vld [vmem:[%s1] sm:$0xff]
    %v65 = vld [vmem:[%s2] sm:$0xff]
    %v66 = vld [vmem:[%s2 + $0x8] sm:$0xff]
    %v67 = vld [vmem:[%s3] sm:$0xff]
    %v68 = vld [vmem:[%s4] sm:$0xf]
    %v69 = vld [vmem:[%s10] sm:$0xff]
    %v70 = vld [vmem:[%s10 + $0x8] sm:$0xff]
    %v71 = vmul.f32 %v62, %v62
    %v72 = vmul.f32 %v63, %v63
    %75 = vrot.lane.b32.xlu0 %v71, 127
    %v76 = vpop.permute.xlu0 %75
    %77 = vrot.lane.b32.xlu0 %v72, 127
    %v78 = vpop.permute.xlu0 %77
    %v81 = vadd.f32 %v71, %v76
    %v82 = vadd.f32 %v72, %v78
    %83 = vrot.lane.b32.xlu0 %v71, 126
    %v84 = vpop.permute.xlu0 %83
    %85 = vrot.lane.b32.xlu0 %v72, 126
    %v86 = vpop.permute.xlu0 %85
    %v89 = vadd.f32 %v81, %v84
    %v90 = vadd.f32 %v82, %v86
    %v91 = vrsqrt.pop %v89
    %v92 = vmul.f32 %v89, %v91
    %vm93 = vcmp.eq.f32.partialorder %v89, inf
    %v94 = vsel %vm93, %v89, %v92
    %vm95 = vcmp.eq.f32.partialorder %v89, 0.0
    %v96 = vand.u32 %v89, 2147483648
    %v97 = vsel %vm95, %v96, %v94
    %v98 = vrsqrt.pop %v90
    %v99 = vmul.f32 %v90, %v98
    %vm100 = vcmp.eq.f32.partialorder %v90, inf
    %v101 = vsel %vm100, %v90, %v99
    %vm102 = vcmp.eq.f32.partialorder %v90, 0.0
    %v103 = vand.u32 %v90, 2147483648
    %v104 = vsel %vm102, %v103, %v101
    %v105 = vmax.f32 %v97, 1e-09
    %v106 = vmax.f32 %v104, 1e-09
    %v107 = vrcp.pop %v105
    %v108 = vmul.f32 1.0, %v107
    %v109 = vrcp.pop %v106
    %v110 = vmul.f32 1.0, %v109
    %v111 = vlaneseq
    %v112 = vand.u32 %v111, 127
    %v113 = vcvt.s32.f32 %v112
    %v114 = vadd.f32 %v113, 1.0
    %v115 = vmul.f32 %v114, 0.7853982
    %117 = vset.pattern.permute.xlu0 0
    %118 = vperm.xlu0 %117, %v97
    %v119 = vpop.permute.xlu0 %118
    %122 = vset.pattern.permute.xlu0 0
    %123 = vperm.xlu0 %122, %v104
    %v124 = vpop.permute.xlu0 %123
    %v126 = vmul.f32 %v115, %v119
    %v127 = vmul.f32 %v115, %v124
    %v128 = vand.u32 2147483647, %v126
    %vm129 = vcmp.le.f32.partialorder %v128, 0.7853982
    %vm130 = vcmp.lt.s32.totalorder %v126, 0
    %v131 = vand.u32 %v126, 2139095040
    %v132 = vshrl.u32 %v131, 23
    %v133 = vsub.s32 %v132, 127
    %v134 = vand.u32 2147483647, %v126
    %v135 = vand.u32 %v134, 8388607
    %v136 = vor.u32 %v135, 8388608
    %v137 = vsub.s32 0, %v136
    %v138 = vadd.s32 %v133, 1
    %vm139 = vcmp.gt.s32.totalorder %v138, 0
    %v140 = vsel %vm139, %v138, 0
    %v141 = vshrl.u32 %v140, 5
    %v142 = vand.u32 %v140, 31
    %v143 = vsub.s32 32, %v142
    %v144 = vshrl.u32 683565275, %v143
    %v145 = vshll.u32 683565275, %v142
    %v146 = vshrl.u32 2475754826, %v143
    %v147 = vor.u32 %v145, %v146
    %v148 = vshll.u32 2475754826, %v142
    %v149 = vshrl.u32 2131351028, %v143
    %v150 = vor.u32 %v148, %v149
    %v151 = vshll.u32 2131351028, %v142
    %v152 = vshrl.u32 2102212464, %v143
    %v153 = vor.u32 %v151, %v152
    %v154 = vshll.u32 2102212464, %v142
    %v155 = vshrl.u32 920167782, %v143
    %v156 = vor.u32 %v154, %v155
    %v157 = vshll.u32 920167782, %v142
    %v158 = vshrl.u32 1326507024, %v143
    %v159 = vor.u32 %v157, %v158
    %vm160 = vcmp.lt.s32.totalorder %v141, 1
    %vm161 = vcmp.lt.s32.totalorder %v141, 2
    %vm162 = vcmp.lt.s32.totalorder %v141, 3
    %vm163 = vcmp.lt.s32.totalorder %v141, 4
    %v164 = vsel %vm160, %v144, %v147
    %v165 = vsel %vm163, %v153, 2102212464
    %v166 = vsel %vm162, %v150, %v165
    %v167 = vsel %vm161, %v164, %v166
    %v168 = vsel %vm160, %v147, %v150
    %v169 = vsel %vm163, %v156, 920167782
    %v170 = vsel %vm162, %v153, %v169
    %v171 = vsel %vm161, %v168, %v170
    %v172 = vsel %vm160, %v150, %v153
    %v173 = vsel %vm163, %v159, 1326507024
    %v174 = vsel %vm162, %v156, %v173
    %v175 = vsel %vm161, %v172, %v174
    %v176 = vshll.u32 %v136, 8
    %v177 = vmul.u32.u64.compose %v176, %v175
    %v178 = vextract.low.u32 %v177
    %v179 = vextract.high.u32 %v177
    %v180 = vmul.u32.u64.compose %v176, %v171
    %v181 = vextract.low.u32 %v180
    %v182 = vextract.high.u32 %v180
    %v183 = vmul.u32 %v176, %v167
    %v184 = vadd.s32 %v179, %v181
    %vm185 = vc.u32 %v179, %v181
    %v186 = vadd.s32 %v182, 1
    %v187 = vsel %vm185, %v186, %v182
    %v188 = vadd.s32 %v183, %v187
    %v189 = vadd.s32 %v188, 536870912
    %v190 = vshrl.u32 %v189, 30
    %v191 = vshll.u32 %v190, 30
    %v192 = vsub.s32 %v188, %v191
    %vm193 = vcmp.lt.s32.totalorder %v192, 0
    %v194 = vsub.s32 0, %v192
    %v195 = vsel %vm193, %v194, %v192
    %v196 = vclz %v195
    %v197 = vsub.s32 %v196, 2
    %vm198 = vcmp.gt.s32.totalorder 0, %v197
    %v199 = vsel %vm198, 0, %v197
    %v200 = vsub.s32 32, %v199
    %v201 = vshll.u32 %v192, %v199
    %v202 = vshrl.u32 %v184, %v200
    %v203 = vor.u32 %v201, %v202
    %v204 = vsub.s32 4294967266, %v199
    %v205 = vadd.s32 %v204, 127
    %v206 = vshll.u32 %v205, 23
    %v207 = vor.u32 4788187, %v206
    %v208 = vand.u32 2147483647, %v207
    %v210 = vcvt.s32.f32 %v203
    %v211 = vmul.f32 %v210, %v208
    %v212 = vxor.u32 %v211, 2147483648
    %v213 = vsel %vm130, %v212, %v211
    %v214 = vsub.s32 4, %v190
    %v215 = vsel %vm130, %v214, %v190
    %v216 = vsel %vm129, %v126, %v213
    %v217 = vsel %vm129, 0, %v215
    %v218 = vcosq.f32.pop %v216
    %v219 = vsinq.f32.pop %v216
    %vm220 = vweird.f32 %v126
    %v221 = vadd.s32 %v217, 3
    %v222 = vand.u32 %v221, 3
    %vm223 = vcmp.lt.s32.totalorder %v222, 2
    %vm224 = vcmp.eq.s32.totalorder %v222, 0
    %v225 = vxor.u32 %v219, 2147483648
    %v226 = vsel %vm224, %v218, %v225
    %vm227 = vcmp.eq.s32.totalorder %v222, 2
    %v228 = vxor.u32 %v218, 2147483648
    %v229 = vsel %vm227, %v228, %v219
    %v230 = vsel %vm223, %v226, %v229
    %v231 = vsel %vm220, nan, %v230
    %v232 = vand.u32 2147483647, %v127
    %vm233 = vcmp.le.f32.partialorder %v232, 0.7853982
    %vm234 = vcmp.lt.s32.totalorder %v127, 0
    %v235 = vand.u32 %v127, 2139095040
    %v236 = vshrl.u32 %v235, 23
    %v237 = vsub.s32 %v236, 127
    %v238 = vand.u32 2147483647, %v127
    %v239 = vand.u32 %v238, 8388607
    %v240 = vor.u32 %v239, 8388608
    %v241 = vsub.s32 0, %v240
    %v242 = vadd.s32 %v237, 1
    %vm243 = vcmp.gt.s32.totalorder %v242, 0
    %v244 = vsel %vm243, %v242, 0
    %v245 = vshrl.u32 %v244, 5
    %v246 = vand.u32 %v244, 31
    %v247 = vsub.s32 32, %v246
    %v248 = vshrl.u32 683565275, %v247
    %v249 = vshll.u32 683565275, %v246
    %v250 = vshrl.u32 2475754826, %v247
    %v251 = vor.u32 %v249, %v250
    %v252 = vshll.u32 2475754826, %v246
    %v253 = vshrl.u32 2131351028, %v247
    %v254 = vor.u32 %v252, %v253
    %v255 = vshll.u32 2131351028, %v246
    %v256 = vshrl.u32 2102212464, %v247
    %v257 = vor.u32 %v255, %v256
    %v258 = vshll.u32 2102212464, %v246
    %v259 = vshrl.u32 920167782, %v247
    %v260 = vor.u32 %v258, %v259
    %v261 = vshll.u32 920167782, %v246
    %v262 = vshrl.u32 1326507024, %v247
    %v263 = vor.u32 %v261, %v262
    %vm264 = vcmp.lt.s32.totalorder %v245, 1
    %vm265 = vcmp.lt.s32.totalorder %v245, 2
    %vm266 = vcmp.lt.s32.totalorder %v245, 3
    %vm267 = vcmp.lt.s32.totalorder %v245, 4
    %v268 = vsel %vm264, %v248, %v251
    %v269 = vsel %vm267, %v257, 2102212464
    %v270 = vsel %vm266, %v254, %v269
    %v271 = vsel %vm265, %v268, %v270
    %v272 = vsel %vm264, %v251, %v254
    %v273 = vsel %vm267, %v260, 920167782
    %v274 = vsel %vm266, %v257, %v273
    %v275 = vsel %vm265, %v272, %v274
    %v276 = vsel %vm264, %v254, %v257
    %v277 = vsel %vm267, %v263, 1326507024
    %v278 = vsel %vm266, %v260, %v277
    %v279 = vsel %vm265, %v276, %v278
    %v280 = vshll.u32 %v240, 8
    %v281 = vmul.u32.u64.compose %v280, %v279
    %v282 = vextract.low.u32 %v281
    %v283 = vextract.high.u32 %v281
    %v284 = vmul.u32.u64.compose %v280, %v275
    %v285 = vextract.low.u32 %v284
    %v286 = vextract.high.u32 %v284
    %v287 = vmul.u32 %v280, %v271
    %v288 = vadd.s32 %v283, %v285
    %vm289 = vc.u32 %v283, %v285
    %v290 = vadd.s32 %v286, 1
    %v291 = vsel %vm289, %v290, %v286
    %v292 = vadd.s32 %v287, %v291
    %v293 = vadd.s32 %v292, 536870912
    %v294 = vshrl.u32 %v293, 30
    %v295 = vshll.u32 %v294, 30
    %v296 = vsub.s32 %v292, %v295
    %vm297 = vcmp.lt.s32.totalorder %v296, 0
    %v298 = vsub.s32 0, %v296
    %v299 = vsel %vm297, %v298, %v296
    %v300 = vclz %v299
    %v301 = vsub.s32 %v300, 2
    %vm302 = vcmp.gt.s32.totalorder 0, %v301
    %v303 = vsel %vm302, 0, %v301
    %v304 = vsub.s32 32, %v303
    %v305 = vshll.u32 %v296, %v303
    %v306 = vshrl.u32 %v288, %v304
    %v307 = vor.u32 %v305, %v306
    %v308 = vsub.s32 4294967266, %v303
    %v309 = vadd.s32 %v308, 127
    %v310 = vshll.u32 %v309, 23
    %v311 = vor.u32 4788187, %v310
    %v312 = vand.u32 2147483647, %v311
    %v314 = vcvt.s32.f32 %v307
    %v315 = vmul.f32 %v314, %v312
    %v316 = vxor.u32 %v315, 2147483648
    %v317 = vsel %vm234, %v316, %v315
    %v318 = vsub.s32 4, %v294
    %v319 = vsel %vm234, %v318, %v294
    %v320 = vsel %vm233, %v127, %v317
    %v321 = vsel %vm233, 0, %v319
    %v322 = vcosq.f32.pop %v320
    %v323 = vsinq.f32.pop %v320
    %vm324 = vweird.f32 %v127
    %v325 = vadd.s32 %v321, 3
    %v326 = vand.u32 %v325, 3
    %vm327 = vcmp.lt.s32.totalorder %v326, 2
    %vm328 = vcmp.eq.s32.totalorder %v326, 0
    %v329 = vxor.u32 %v323, 2147483648
    %v330 = vsel %vm328, %v322, %v329
    %vm331 = vcmp.eq.s32.totalorder %v326, 2
    %v332 = vxor.u32 %v322, 2147483648
    %v333 = vsel %vm331, %v332, %v323
    %v334 = vsel %vm327, %v330, %v333
    %v335 = vsel %vm324, nan, %v334
    %v336 = vmul.f32 %v231, 0.70710677
    %v337 = vmul.f32 %v335, 0.70710677
    %339 = vset.pattern.permute.xlu0 0
    %340 = vperm.xlu0 %339, %v108
    %v341 = vpop.permute.xlu0 %340
    %344 = vset.pattern.permute.xlu0 0
    %345 = vperm.xlu0 %344, %v110
    %v346 = vpop.permute.xlu0 %345
    %v348 = vmul.f32 %v336, %v341
    %v349 = vmul.f32 %v337, %v346
    %v350 = vmul.f32 %v97, 0.25
    %v351 = vmul.f32 %v104, 0.25
    %v352 = vmul.f32 %v350, %v350
    %v353 = vmul.f32 %v351, %v351
    %v354 = vmul.f32 %v352, %v352
    %v355 = vmul.f32 %v353, %v353
    %v356 = vmul.f32 %v354, %v352
    %v357 = vmul.f32 %v355, %v353
    %v358 = vmul.f32 %v356, %v350
    %v359 = vmul.f32 %v357, %v351
    %v360 = vmul.f32 %v356, %v352
    %v361 = vmul.f32 %v357, %v353
    %v362 = vmul.f32 %v356, 28.0
    %v363 = vmul.f32 %v357, 28.0
    %v364 = vsub.f32 1.0, %v362
    %v365 = vsub.f32 1.0, %v363
    %v366 = vmul.f32 %v358, 48.0
    %v367 = vmul.f32 %v359, 48.0
    %v368 = vadd.f32 %v364, %v366
    %v369 = vadd.f32 %v365, %v367
    %v370 = vmul.f32 %v360, 21.0
    %v371 = vmul.f32 %v361, 21.0
    %v372 = vsub.f32 %v368, %v370
    %v373 = vsub.f32 %v369, %v371
    %vm374 = vcmp.lt.f32.partialorder %v350, 1.0
    %vm375 = vcmp.lt.f32.partialorder %v351, 1.0
    %v376 = vsel %vm374, %v372, 0.0
    %v377 = vsel %vm375, %v373, 0.0
    %379 = vset.pattern.permute.xlu0 0
    %380 = vperm.xlu0 %379, %v376
    %v381 = vpop.permute.xlu0 %380
    %384 = vset.pattern.permute.xlu0 0
    %385 = vperm.xlu0 %384, %v377
    %v386 = vpop.permute.xlu0 %385
    %v388 = vmul.f32 %v348, %v381
    %v389 = vmul.f32 %v349, %v386
    %v390 = vmul.f32 %v62, %v108
    %v391 = vmul.f32 %v63, %v110
    %392 = vrot.lane.b32.xlu0 %v108, 1
    %v393 = vpop.permute.xlu0 %392
    %394 = vrot.lane.b32.xlu0 %v110, 1
    %v395 = vpop.permute.xlu0 %394
    %v398 = vmul.f32 %v62, %v393
    %v399 = vmul.f32 %v63, %v395
    %400 = vrot.lane.b32.xlu0 %v108, 2
    %v401 = vpop.permute.xlu0 %400
    %402 = vrot.lane.b32.xlu0 %v110, 2
    %v403 = vpop.permute.xlu0 %402
    %v406 = vmul.f32 %v62, %v401
    %v407 = vmul.f32 %v63, %v403
    %v408 = vmul.f32 %v390, 1.7320508
    %v409 = vmul.f32 %v391, 1.7320508
    %v410 = vmul.f32 %v398, 1.7320508
    %v411 = vmul.f32 %v399, 1.7320508
    %v412 = vmul.f32 %v406, 1.7320508
    %v413 = vmul.f32 %v407, 1.7320508
    %v414 = vmul.f32 %v390, 3.8729835
    %v415 = vmul.f32 %v391, 3.8729835
    %418 = vrot.lane.b32.xlu0 %v398, 127
    %v419 = vpop.permute.xlu0 %418
    %420 = vrot.lane.b32.xlu0 %v399, 127
    %v421 = vpop.permute.xlu0 %420
    %v424 = vmul.f32 %v414, %v419
    %v425 = vmul.f32 %v415, %v421
    %v426 = vmul.f32 %v398, 3.8729835
    %v427 = vmul.f32 %v399, 3.8729835
    %430 = vrot.lane.b32.xlu0 %v406, 127
    %v431 = vpop.permute.xlu0 %430
    %432 = vrot.lane.b32.xlu0 %v407, 127
    %v433 = vpop.permute.xlu0 %432
    %v436 = vmul.f32 %v426, %v431
    %v437 = vmul.f32 %v427, %v433
    %v438 = vmul.f32 %v406, 3.0
    %v439 = vmul.f32 %v407, 3.0
    %v440 = vmul.f32 %v438, %v406
    %v441 = vmul.f32 %v439, %v407
    %v442 = vsub.f32 %v440, 1.0
    %v443 = vsub.f32 %v441, 1.0
    %v444 = vmul.f32 %v442, 1.118034
    %v445 = vmul.f32 %v443, 1.118034
    %446 = vrot.lane.b32.xlu0 %v406, 126
    %v447 = vpop.permute.xlu0 %446
    %448 = vrot.lane.b32.xlu0 %v407, 126
    %v449 = vpop.permute.xlu0 %448
    %v452 = vmul.f32 %v414, %v447
    %v453 = vmul.f32 %v415, %v449
    %v454 = vmul.f32 %v390, %v390
    %v455 = vmul.f32 %v391, %v391
    %v456 = vmul.f32 %v398, %v398
    %v457 = vmul.f32 %v399, %v399
    %460 = vrot.lane.b32.xlu0 %v456, 127
    %v461 = vpop.permute.xlu0 %460
    %462 = vrot.lane.b32.xlu0 %v457, 127
    %v463 = vpop.permute.xlu0 %462
    %v466 = vsub.f32 %v454, %v461
    %v467 = vsub.f32 %v455, %v463
    %v468 = vmul.f32 %v466, 1.9364917
    %v469 = vmul.f32 %v467, 1.9364917
    %vm470 = vcmp.eq.s32.totalorder %v112, 0
    %v471 = vsel %vm470, 1.0, 0.0
    %v472 = vadd.f32 %v471, 0.0
    %vm473 = vcmp.eq.s32.totalorder %v112, 1
    %475 = vset.pattern.permute.xlu0 0
    %476 = vperm.xlu0 %475, %v408
    %v477 = vpop.permute.xlu0 %476
    %480 = vset.pattern.permute.xlu0 0
    %481 = vperm.xlu0 %480, %v409
    %v482 = vpop.permute.xlu0 %481
    %v484 = vsel %vm473, %v477, 0.0
    %v485 = vsel %vm473, %v482, 0.0
    %v486 = vadd.f32 %v472, %v484
    %v487 = vadd.f32 %v472, %v485
    %vm488 = vcmp.eq.s32.totalorder %v112, 2
    %490 = vset.pattern.permute.xlu0 1
    %491 = vperm.xlu0 %490, %v410
    %v492 = vpop.permute.xlu0 %491
    %495 = vset.pattern.permute.xlu0 1
    %496 = vperm.xlu0 %495, %v411
    %v497 = vpop.permute.xlu0 %496
    %v499 = vsel %vm488, %v492, 0.0
    %v500 = vsel %vm488, %v497, 0.0
    %v501 = vadd.f32 %v486, %v499
    %v502 = vadd.f32 %v487, %v500
    %vm503 = vcmp.eq.s32.totalorder %v112, 3
    %505 = vset.pattern.permute.xlu0 2
    %506 = vperm.xlu0 %505, %v412
    %v507 = vpop.permute.xlu0 %506
    %510 = vset.pattern.permute.xlu0 2
    %511 = vperm.xlu0 %510, %v413
    %v512 = vpop.permute.xlu0 %511
    %v514 = vsel %vm503, %v507, 0.0
    %v515 = vsel %vm503, %v512, 0.0
    %v516 = vadd.f32 %v501, %v514
    %v517 = vadd.f32 %v502, %v515
    %vm518 = vcmp.eq.s32.totalorder %v112, 4
    %520 = vset.pattern.permute.xlu0 0
    %521 = vperm.xlu0 %520, %v424
    %v522 = vpop.permute.xlu0 %521
    %525 = vset.pattern.permute.xlu0 0
    %526 = vperm.xlu0 %525, %v425
    %v527 = vpop.permute.xlu0 %526
    %v529 = vsel %vm518, %v522, 0.0
    %v530 = vsel %vm518, %v527, 0.0
    %v531 = vadd.f32 %v516, %v529
    %v532 = vadd.f32 %v517, %v530
    %vm533 = vcmp.eq.s32.totalorder %v112, 5
    %535 = vset.pattern.permute.xlu0 1
    %536 = vperm.xlu0 %535, %v436
    %v537 = vpop.permute.xlu0 %536
    %540 = vset.pattern.permute.xlu0 1
    %541 = vperm.xlu0 %540, %v437
    %v542 = vpop.permute.xlu0 %541
    %v544 = vsel %vm533, %v537, 0.0
    %v545 = vsel %vm533, %v542, 0.0
    %v546 = vadd.f32 %v531, %v544
    %v547 = vadd.f32 %v532, %v545
    %vm548 = vcmp.eq.s32.totalorder %v112, 6
    %550 = vset.pattern.permute.xlu0 2
    %551 = vperm.xlu0 %550, %v444
    %v552 = vpop.permute.xlu0 %551
    %555 = vset.pattern.permute.xlu0 2
    %556 = vperm.xlu0 %555, %v445
    %v557 = vpop.permute.xlu0 %556
    %v559 = vsel %vm548, %v552, 0.0
    %v560 = vsel %vm548, %v557, 0.0
    %v561 = vadd.f32 %v546, %v559
    %v562 = vadd.f32 %v547, %v560
    %vm563 = vcmp.eq.s32.totalorder %v112, 7
    %565 = vset.pattern.permute.xlu0 0
    %566 = vperm.xlu0 %565, %v452
    %v567 = vpop.permute.xlu0 %566
    %570 = vset.pattern.permute.xlu0 0
    %571 = vperm.xlu0 %570, %v453
    %v572 = vpop.permute.xlu0 %571
    %v574 = vsel %vm563, %v567, 0.0
    %v575 = vsel %vm563, %v572, 0.0
    %v576 = vadd.f32 %v561, %v574
    %v577 = vadd.f32 %v562, %v575
    %vm578 = vcmp.eq.s32.totalorder %v112, 8
    %580 = vset.pattern.permute.xlu0 0
    %581 = vperm.xlu0 %580, %v468
    %v582 = vpop.permute.xlu0 %581
    %585 = vset.pattern.permute.xlu0 0
    %586 = vperm.xlu0 %585, %v469
    %v587 = vpop.permute.xlu0 %586
    %v589 = vsel %vm578, %v582, 0.0
    %v590 = vsel %vm578, %v587, 0.0
    %v591 = vadd.f32 %v576, %v589
    %v592 = vadd.f32 %v577, %v590
    %vm593 = vcmask 31744
    %v595 = vsel %vm593, %v64, 0
    %vm597 = vcmask 1043456
    %v599 = vsel %vm597, %v68, 0
    %601 = vmatprep.subr.mxu0 0.0
    %602 = vmatpush1.msra.mxu0 0.0
    %603 = vmatprep.subr.mxu0 0.0
    %604 = vmatpush1.msra.mxu0 0.0
    %605 = vmatprep.subr.mxu0 0.0
    %606 = vmatpush1.msra.mxu0 0.0
    %607 = vmatprep.subr.mxu0 0.0
    %608 = vmatpush1.msra.mxu0 0.0
    %609 = vmatprep.subr.mxu0 0.0
    %610 = vmatpush1.msra.mxu0 0.0
    %611 = vmatprep.subr.mxu0 0.0
    %612 = vmatpush1.msra.mxu0 0.0
    %613 = vmatprep.subr.mxu0 0.0
    %614 = vmatpush1.msra.mxu0 0.0
    %615 = vmatprep.subr.mxu0 0.0
    %616 = vmatpush1.msra.mxu0 0.0
    %617 = vmatprep.subr.mxu0 0.0
    %618 = vmatpush1.msra.mxu0 0.0
    %619 = vmatprep.subr.mxu0 0.0
    %620 = vmatpush1.msra.mxu0 0.0
    %621 = vmatprep.subr.mxu0 0.0
    %622 = vmatpush1.msra.mxu0 0.0
    %623 = vmatprep.subr.mxu0 0.0
    %624 = vmatpush1.msra.mxu0 0.0
    %625 = vmatprep.subr.mxu0 0.0
    %626 = vmatpush1.msra.mxu0 0.0
    %627 = vmatprep.subr.mxu0 0.0
    %628 = vmatpush1.msra.mxu0 0.0
    %629 = vmatprep.subr.mxu0 0.0
    %630 = vmatpush1.msra.mxu0 0.0
    %631 = vmatprep.subr.mxu0 0.0
    %632 = vmatpush1.msra.mxu0 %v599
    %633 = vmatprep.subr.mxu0 0.0
    %634 = vmatpush2.msra.mxu0 0.0
    %635 = vmatprep.subr.mxu0 0.0
    %636 = vmatpush2.msra.mxu0 0.0
    %637 = vmatprep.subr.mxu0 0.0
    %638 = vmatpush2.msra.mxu0 0.0
    %639 = vmatprep.subr.mxu0 0.0
    %640 = vmatpush2.msra.mxu0 0.0
    %641 = vmatprep.subr.mxu0 0.0
    %642 = vmatpush2.msra.mxu0 0.0
    %643 = vmatprep.subr.mxu0 0.0
    %644 = vmatpush2.msra.mxu0 0.0
    %645 = vmatprep.subr.mxu0 0.0
    %646 = vmatpush2.msra.mxu0 0.0
    %647 = vmatprep.subr.mxu0 0.0
    %648 = vmatpush2.msra.mxu0 0.0
    %649 = vmatprep.subr.mxu0 0.0
    %650 = vmatpush2.msra.mxu0 0.0
    %651 = vmatprep.subr.mxu0 0.0
    %652 = vmatpush2.msra.mxu0 0.0
    %653 = vmatprep.subr.mxu0 0.0
    %654 = vmatpush2.msra.mxu0 0.0
    %655 = vmatprep.subr.mxu0 0.0
    %656 = vmatpush2.msra.mxu0 0.0
    %657 = vmatprep.subr.mxu0 0.0
    %658 = vmatpush2.msra.mxu0 0.0
    %659 = vmatprep.subr.mxu0 0.0
    %660 = vmatpush2.msra.mxu0 0.0
    %661 = vmatprep.subr.mxu0 0.0
    %662 = vmatpush2.msra.mxu0 0.0
    %663 = vmatprep.subr.mxu0 0.0
    %664 = vmatpush2.msra.mxu0 0.0
    %665 = vmatprep.mubr.f32.mxu0 0.0
    %666 = vmatmul.mubr.f32.gmra.mxu0 %v595
    %v667 = vpop.f32.mrf.mxu0
    %v668 = vadd.f32 0.0, %v667
    %v669 = vpop.f32.mrf.mxu0
    %670 = vdwg.mxu0
    %vm671 = vcmask 130048
    %v673 = vsel %vm671, %v668, 0
    %675 = vmatprep.subr.mxu0 0.0
    %676 = vmatpush1.msra.mxu0 0.0
    %677 = vmatprep.subr.mxu0 0.0
    %678 = vmatpush1.msra.mxu0 0.0
    %679 = vmatprep.subr.mxu0 0.0
    %680 = vmatpush1.msra.mxu0 0.0
    %681 = vmatprep.subr.mxu0 0.0
    %682 = vmatpush1.msra.mxu0 0.0
    %683 = vmatprep.subr.mxu0 0.0
    %684 = vmatpush1.msra.mxu0 0.0
    %685 = vmatprep.subr.mxu0 0.0
    %686 = vmatpush1.msra.mxu0 0.0
    %687 = vmatprep.subr.mxu0 0.0
    %688 = vmatpush1.msra.mxu0 0.0
    %689 = vmatprep.subr.mxu0 0.0
    %690 = vmatpush1.msra.mxu0 0.0
    %691 = vmatprep.subr.mxu0 0.0
    %692 = vmatpush1.msra.mxu0 0.0
    %693 = vmatprep.subr.mxu0 0.0
    %694 = vmatpush1.msra.mxu0 0.0
    %695 = vmatprep.subr.mxu0 0.0
    %696 = vmatpush1.msra.mxu0 0.0
    %697 = vmatprep.subr.mxu0 0.0
    %698 = vmatpush1.msra.mxu0 0.0
    %699 = vmatprep.subr.mxu0 0.0
    %700 = vmatpush1.msra.mxu0 0.0
    %701 = vmatprep.subr.mxu0 0.0
    %702 = vmatpush1.msra.mxu0 0.0
    %703 = vmatprep.subr.mxu0 0.0
    %704 = vmatpush1.msra.mxu0 %v40
    %705 = vmatprep.subr.mxu0 0.0
    %706 = vmatpush1.msra.mxu0 %v39
    %707 = vmatprep.subr.mxu0 0.0
    %708 = vmatpush2.msra.mxu0 0.0
    %709 = vmatprep.subr.mxu0 0.0
    %710 = vmatpush2.msra.mxu0 0.0
    %711 = vmatprep.subr.mxu0 0.0
    %712 = vmatpush2.msra.mxu0 0.0
    %713 = vmatprep.subr.mxu0 0.0
    %714 = vmatpush2.msra.mxu0 0.0
    %715 = vmatprep.subr.mxu0 0.0
    %716 = vmatpush2.msra.mxu0 0.0
    %717 = vmatprep.subr.mxu0 0.0
    %718 = vmatpush2.msra.mxu0 0.0
    %719 = vmatprep.subr.mxu0 0.0
    %720 = vmatpush2.msra.mxu0 0.0
    %721 = vmatprep.subr.mxu0 0.0
    %722 = vmatpush2.msra.mxu0 0.0
    %723 = vmatprep.subr.mxu0 0.0
    %724 = vmatpush2.msra.mxu0 0.0
    %725 = vmatprep.subr.mxu0 0.0
    %726 = vmatpush2.msra.mxu0 0.0
    %727 = vmatprep.subr.mxu0 0.0
    %728 = vmatpush2.msra.mxu0 0.0
    %729 = vmatprep.subr.mxu0 0.0
    %730 = vmatpush2.msra.mxu0 0.0
    %731 = vmatprep.subr.mxu0 0.0
    %732 = vmatpush2.msra.mxu0 0.0
    %733 = vmatprep.subr.mxu0 0.0
    %734 = vmatpush2.msra.mxu0 0.0
    %735 = vmatprep.subr.mxu0 0.0
    %736 = vmatpush2.msra.mxu0 0.0
    %737 = vmatprep.subr.mxu0 0.0
    %738 = vmatpush2.msra.mxu0 0.0
    %739 = vmatprep.mubr.f32.mxu0 0.0
    %740 = vmatmul.mubr.f32.gmra.mxu0 %v673
    %v741 = vpop.f32.mrf.mxu0
    %v742 = vadd.f32 0.0, %v741
    %v743 = vpop.f32.mrf.mxu0
    %744 = vdwg.mxu0
    %vm745 = vcmask 64512
    %v747 = vsel %vm745, %v65, 0
    %v750 = vsel %vm745, %v66, 0
    %752 = vmatprep.subr.mxu0 0.0
    %753 = vmatpush1.msra.mxu0 0.0
    %754 = vmatprep.subr.mxu0 0.0
    %755 = vmatpush1.msra.mxu0 0.0
    %756 = vmatprep.subr.mxu0 0.0
    %757 = vmatpush1.msra.mxu0 0.0
    %758 = vmatprep.subr.mxu0 0.0
    %759 = vmatpush1.msra.mxu0 0.0
    %760 = vmatprep.subr.mxu0 0.0
    %761 = vmatpush1.msra.mxu0 0.0
    %762 = vmatprep.subr.mxu0 0.0
    %763 = vmatpush1.msra.mxu0 0.0
    %764 = vmatprep.subr.mxu0 0.0
    %765 = vmatpush1.msra.mxu0 0.0
    %766 = vmatprep.subr.mxu0 0.0
    %767 = vmatpush1.msra.mxu0 0.0
    %768 = vmatprep.subr.mxu0 0.0
    %769 = vmatpush1.msra.mxu0 0.0
    %770 = vmatprep.subr.mxu0 0.0
    %771 = vmatpush1.msra.mxu0 0.0
    %772 = vmatprep.subr.mxu0 0.0
    %773 = vmatpush1.msra.mxu0 0.0
    %774 = vmatprep.subr.mxu0 0.0
    %775 = vmatpush1.msra.mxu0 0.0
    %776 = vmatprep.subr.mxu0 0.0
    %777 = vmatpush1.msra.mxu0 0.0
    %778 = vmatprep.subr.mxu0 0.0
    %779 = vmatpush1.msra.mxu0 0.0
    %780 = vmatprep.subr.mxu0 0.0
    %781 = vmatpush1.msra.mxu0 0.0
    %782 = vmatprep.subr.mxu0 0.0
    %783 = vmatpush1.msra.mxu0 %v742
    %784 = vmatprep.subr.mxu0 0.0
    %785 = vmatpush2.msra.mxu0 0.0
    %786 = vmatprep.subr.mxu0 0.0
    %787 = vmatpush2.msra.mxu0 0.0
    %788 = vmatprep.subr.mxu0 0.0
    %789 = vmatpush2.msra.mxu0 0.0
    %790 = vmatprep.subr.mxu0 0.0
    %791 = vmatpush2.msra.mxu0 0.0
    %792 = vmatprep.subr.mxu0 0.0
    %793 = vmatpush2.msra.mxu0 0.0
    %794 = vmatprep.subr.mxu0 0.0
    %795 = vmatpush2.msra.mxu0 0.0
    %796 = vmatprep.subr.mxu0 0.0
    %797 = vmatpush2.msra.mxu0 0.0
    %798 = vmatprep.subr.mxu0 0.0
    %799 = vmatpush2.msra.mxu0 0.0
    %800 = vmatprep.subr.mxu0 0.0
    %801 = vmatpush2.msra.mxu0 0.0
    %802 = vmatprep.subr.mxu0 0.0
    %803 = vmatpush2.msra.mxu0 0.0
    %804 = vmatprep.subr.mxu0 0.0
    %805 = vmatpush2.msra.mxu0 0.0
    %806 = vmatprep.subr.mxu0 0.0
    %807 = vmatpush2.msra.mxu0 0.0
    %808 = vmatprep.subr.mxu0 0.0
    %809 = vmatpush2.msra.mxu0 0.0
    %810 = vmatprep.subr.mxu0 0.0
    %811 = vmatpush2.msra.mxu0 0.0
    %812 = vmatprep.subr.mxu0 0.0
    %813 = vmatpush2.msra.mxu0 0.0
    %814 = vmatprep.subr.mxu0 0.0
    %815 = vmatpush2.msra.mxu0 0.0
    %816 = vmatprep.mubr.f32.mxu0 0.0
    %817 = vmatmul.mubr.f32.gmra.mxu0 %v747
    %v818 = vpop.f32.mrf.mxu0
    %v819 = vadd.f32 0.0, %v818
    %v820 = vpop.f32.mrf.mxu0
    %821 = vmatprep.mubr.f32.mxu0 0.0
    %822 = vmatmul.mubr.f32.gmra.mxu0 %v750
    %v823 = vpop.f32.mrf.mxu0
    %v824 = vadd.f32 0.0, %v823
    %v825 = vpop.f32.mrf.mxu0
    %826 = vdwg.mxu0
    %v828 = vsel %vm745, %v388, 0
    %v831 = vsel %vm745, %v389, 0
    %833 = vmatprep.subr.mxu0 0.0
    %834 = vmatpush1.msra.mxu0 0.0
    %835 = vmatprep.subr.mxu0 0.0
    %836 = vmatpush1.msra.mxu0 0.0
    %837 = vmatprep.subr.mxu0 0.0
    %838 = vmatpush1.msra.mxu0 0.0
    %839 = vmatprep.subr.mxu0 0.0
    %840 = vmatpush1.msra.mxu0 0.0
    %841 = vmatprep.subr.mxu0 0.0
    %842 = vmatpush1.msra.mxu0 0.0
    %843 = vmatprep.subr.mxu0 0.0
    %844 = vmatpush1.msra.mxu0 0.0
    %845 = vmatprep.subr.mxu0 0.0
    %846 = vmatpush1.msra.mxu0 0.0
    %847 = vmatprep.subr.mxu0 0.0
    %848 = vmatpush1.msra.mxu0 0.0
    %849 = vmatprep.subr.mxu0 0.0
    %850 = vmatpush1.msra.mxu0 0.0
    %851 = vmatprep.subr.mxu0 0.0
    %852 = vmatpush1.msra.mxu0 0.0
    %853 = vmatprep.subr.mxu0 0.0
    %854 = vmatpush1.msra.mxu0 0.0
    %855 = vmatprep.subr.mxu0 0.0
    %856 = vmatpush1.msra.mxu0 0.0
    %857 = vmatprep.subr.mxu0 0.0
    %858 = vmatpush1.msra.mxu0 0.0
    %859 = vmatprep.subr.mxu0 0.0
    %860 = vmatpush1.msra.mxu0 0.0
    %861 = vmatprep.subr.mxu0 0.0
    %862 = vmatpush1.msra.mxu0 0.0
    %863 = vmatprep.subr.mxu0 0.0
    %864 = vmatpush1.msra.mxu0 %v41
    %865 = vmatprep.subr.mxu0 0.0
    %866 = vmatpush2.msra.mxu0 0.0
    %867 = vmatprep.subr.mxu0 0.0
    %868 = vmatpush2.msra.mxu0 0.0
    %869 = vmatprep.subr.mxu0 0.0
    %870 = vmatpush2.msra.mxu0 0.0
    %871 = vmatprep.subr.mxu0 0.0
    %872 = vmatpush2.msra.mxu0 0.0
    %873 = vmatprep.subr.mxu0 0.0
    %874 = vmatpush2.msra.mxu0 0.0
    %875 = vmatprep.subr.mxu0 0.0
    %876 = vmatpush2.msra.mxu0 0.0
    %877 = vmatprep.subr.mxu0 0.0
    %878 = vmatpush2.msra.mxu0 0.0
    %879 = vmatprep.subr.mxu0 0.0
    %880 = vmatpush2.msra.mxu0 0.0
    %881 = vmatprep.subr.mxu0 0.0
    %882 = vmatpush2.msra.mxu0 0.0
    %883 = vmatprep.subr.mxu0 0.0
    %884 = vmatpush2.msra.mxu0 0.0
    %885 = vmatprep.subr.mxu0 0.0
    %886 = vmatpush2.msra.mxu0 0.0
    %887 = vmatprep.subr.mxu0 0.0
    %888 = vmatpush2.msra.mxu0 0.0
    %889 = vmatprep.subr.mxu0 0.0
    %890 = vmatpush2.msra.mxu0 0.0
    %891 = vmatprep.subr.mxu0 0.0
    %892 = vmatpush2.msra.mxu0 0.0
    %893 = vmatprep.subr.mxu0 0.0
    %894 = vmatpush2.msra.mxu0 0.0
    %895 = vmatprep.subr.mxu0 0.0
    %896 = vmatpush2.msra.mxu0 0.0
    %897 = vmatprep.mubr.f32.mxu0 0.0
    %898 = vmatmul.mubr.f32.gmra.mxu0 %v828
    %v899 = vpop.f32.mrf.mxu0
    %v900 = vadd.f32 0.0, %v899
    %v901 = vpop.f32.mrf.mxu0
    %902 = vmatprep.mubr.f32.mxu0 0.0
    %903 = vmatmul.mubr.f32.gmra.mxu0 %v831
    %v904 = vpop.f32.mrf.mxu0
    %v905 = vadd.f32 0.0, %v904
    %v906 = vpop.f32.mrf.mxu0
    %907 = vdwg.mxu0
    %v908 = vand.u32 2147483647, %v900
    %v909 = vand.u32 2147483647, %v905
    %v910 = vsub.f32 0.0, %v908
    %v911 = vsub.f32 0.0, %v909
    %v912 = vmul.f32 %v910, 1.442695
    %v913 = vpow.pop %v912
    %v914 = vmul.f32 %v911, 1.442695
    %v915 = vpow.pop %v914
    %vm916 = vcmp.ge.f32.partialorder %v900, 0.0
    %vm917 = vcmp.ge.f32.partialorder %v905, 0.0
    %v918 = vadd.f32 %v913, 1.0
    %v919 = vadd.f32 %v915, 1.0
    %v920 = vrcp.pop %v918
    %v921 = vmul.f32 1.0, %v920
    %v922 = vrcp.pop %v919
    %v923 = vmul.f32 1.0, %v922
    %v924 = vmul.f32 %v913, %v920
    %v925 = vmul.f32 %v915, %v922
    %v926 = vsel %vm916, %v921, %v924
    %v927 = vsel %vm917, %v923, %v925
    %v928 = vmul.f32 %v900, %v926
    %v929 = vmul.f32 %v905, %v927
    %v931 = vsel %vm671, %v928, 0
    %v934 = vsel %vm671, %v929, 0
    %936 = vmatprep.subr.mxu0 0.0
    %937 = vmatpush1.msra.mxu0 0.0
    %938 = vmatprep.subr.mxu0 0.0
    %939 = vmatpush1.msra.mxu0 0.0
    %940 = vmatprep.subr.mxu0 0.0
    %941 = vmatpush1.msra.mxu0 0.0
    %942 = vmatprep.subr.mxu0 0.0
    %943 = vmatpush1.msra.mxu0 0.0
    %944 = vmatprep.subr.mxu0 0.0
    %945 = vmatpush1.msra.mxu0 0.0
    %946 = vmatprep.subr.mxu0 0.0
    %947 = vmatpush1.msra.mxu0 0.0
    %948 = vmatprep.subr.mxu0 0.0
    %949 = vmatpush1.msra.mxu0 0.0
    %950 = vmatprep.subr.mxu0 0.0
    %951 = vmatpush1.msra.mxu0 0.0
    %952 = vmatprep.subr.mxu0 0.0
    %953 = vmatpush1.msra.mxu0 0.0
    %954 = vmatprep.subr.mxu0 0.0
    %955 = vmatpush1.msra.mxu0 0.0
    %956 = vmatprep.subr.mxu0 0.0
    %957 = vmatpush1.msra.mxu0 0.0
    %958 = vmatprep.subr.mxu0 0.0
    %959 = vmatpush1.msra.mxu0 0.0
    %960 = vmatprep.subr.mxu0 0.0
    %961 = vmatpush1.msra.mxu0 0.0
    %962 = vmatprep.subr.mxu0 0.0
    %963 = vmatpush1.msra.mxu0 0.0
    %964 = vmatprep.subr.mxu0 0.0
    %965 = vmatpush1.msra.mxu0 %v43
    %966 = vmatprep.subr.mxu0 0.0
    %967 = vmatpush1.msra.mxu0 %v42
    %968 = vmatprep.subr.mxu0 0.0
    %969 = vmatpush2.msra.mxu0 0.0
    %970 = vmatprep.subr.mxu0 0.0
    %971 = vmatpush2.msra.mxu0 0.0
    %972 = vmatprep.subr.mxu0 0.0
    %973 = vmatpush2.msra.mxu0 0.0
    %974 = vmatprep.subr.mxu0 0.0
    %975 = vmatpush2.msra.mxu0 0.0
    %976 = vmatprep.subr.mxu0 0.0
    %977 = vmatpush2.msra.mxu0 0.0
    %978 = vmatprep.subr.mxu0 0.0
    %979 = vmatpush2.msra.mxu0 0.0
    %980 = vmatprep.subr.mxu0 0.0
    %981 = vmatpush2.msra.mxu0 0.0
    %982 = vmatprep.subr.mxu0 0.0
    %983 = vmatpush2.msra.mxu0 0.0
    %984 = vmatprep.subr.mxu0 0.0
    %985 = vmatpush2.msra.mxu0 0.0
    %986 = vmatprep.subr.mxu0 0.0
    %987 = vmatpush2.msra.mxu0 0.0
    %988 = vmatprep.subr.mxu0 0.0
    %989 = vmatpush2.msra.mxu0 0.0
    %990 = vmatprep.subr.mxu0 0.0
    %991 = vmatpush2.msra.mxu0 0.0
    %992 = vmatprep.subr.mxu0 0.0
    %993 = vmatpush2.msra.mxu0 0.0
    %994 = vmatprep.subr.mxu0 0.0
    %995 = vmatpush2.msra.mxu0 0.0
    %996 = vmatprep.subr.mxu0 0.0
    %997 = vmatpush2.msra.mxu0 0.0
    %998 = vmatprep.subr.mxu0 0.0
    %999 = vmatpush2.msra.mxu0 0.0
    %1000 = vmatprep.mubr.f32.mxu0 0.0
    %1001 = vmatmul.mubr.f32.gmra.mxu0 %v931
    %v1002 = vpop.f32.mrf.mxu0
    %v1003 = vadd.f32 0.0, %v1002
    %v1004 = vpop.f32.mrf.mxu0
    %1005 = vmatprep.mubr.f32.mxu0 0.0
    %1006 = vmatmul.mubr.f32.gmra.mxu0 %v934
    %v1007 = vpop.f32.mrf.mxu0
    %v1008 = vadd.f32 0.0, %v1007
    %v1009 = vpop.f32.mrf.mxu0
    %1010 = vdwg.mxu0
    %vm1011 = vcmask 72704
    %v1013 = vsel %vm1011, %v591, 0
    %v1016 = vsel %vm1011, %v592, 0
    %vm1018 = vcmask 1040384
    %v1020 = vsel %vm1018, %v45, 0
    %1022 = vmatprep.subr.mxu0 0.0
    %1023 = vmatpush1.msra.mxu0 0.0
    %1024 = vmatprep.subr.mxu0 0.0
    %1025 = vmatpush1.msra.mxu0 0.0
    %1026 = vmatprep.subr.mxu0 0.0
    %1027 = vmatpush1.msra.mxu0 0.0
    %1028 = vmatprep.subr.mxu0 0.0
    %1029 = vmatpush1.msra.mxu0 0.0
    %1030 = vmatprep.subr.mxu0 0.0
    %1031 = vmatpush1.msra.mxu0 0.0
    %1032 = vmatprep.subr.mxu0 0.0
    %1033 = vmatpush1.msra.mxu0 0.0
    %1034 = vmatprep.subr.mxu0 0.0
    %1035 = vmatpush1.msra.mxu0 0.0
    %1036 = vmatprep.subr.mxu0 0.0
    %1037 = vmatpush1.msra.mxu0 0.0
    %1038 = vmatprep.subr.mxu0 0.0
    %1039 = vmatpush1.msra.mxu0 0.0
    %1040 = vmatprep.subr.mxu0 0.0
    %1041 = vmatpush1.msra.mxu0 0.0
    %1042 = vmatprep.subr.mxu0 0.0
    %1043 = vmatpush1.msra.mxu0 0.0
    %1044 = vmatprep.subr.mxu0 0.0
    %1045 = vmatpush1.msra.mxu0 0.0
    %1046 = vmatprep.subr.mxu0 0.0
    %1047 = vmatpush1.msra.mxu0 0.0
    %1048 = vmatprep.subr.mxu0 0.0
    %1049 = vmatpush1.msra.mxu0 0.0
    %1050 = vmatprep.subr.mxu0 0.0
    %1051 = vmatpush1.msra.mxu0 %v1020
    %1052 = vmatprep.subr.mxu0 0.0
    %1053 = vmatpush1.msra.mxu0 %v44
    %1054 = vmatprep.subr.mxu0 0.0
    %1055 = vmatpush2.msra.mxu0 0.0
    %1056 = vmatprep.subr.mxu0 0.0
    %1057 = vmatpush2.msra.mxu0 0.0
    %1058 = vmatprep.subr.mxu0 0.0
    %1059 = vmatpush2.msra.mxu0 0.0
    %1060 = vmatprep.subr.mxu0 0.0
    %1061 = vmatpush2.msra.mxu0 0.0
    %1062 = vmatprep.subr.mxu0 0.0
    %1063 = vmatpush2.msra.mxu0 0.0
    %1064 = vmatprep.subr.mxu0 0.0
    %1065 = vmatpush2.msra.mxu0 0.0
    %1066 = vmatprep.subr.mxu0 0.0
    %1067 = vmatpush2.msra.mxu0 0.0
    %1068 = vmatprep.subr.mxu0 0.0
    %1069 = vmatpush2.msra.mxu0 0.0
    %1070 = vmatprep.subr.mxu0 0.0
    %1071 = vmatpush2.msra.mxu0 0.0
    %1072 = vmatprep.subr.mxu0 0.0
    %1073 = vmatpush2.msra.mxu0 0.0
    %1074 = vmatprep.subr.mxu0 0.0
    %1075 = vmatpush2.msra.mxu0 0.0
    %1076 = vmatprep.subr.mxu0 0.0
    %1077 = vmatpush2.msra.mxu0 0.0
    %1078 = vmatprep.subr.mxu0 0.0
    %1079 = vmatpush2.msra.mxu0 0.0
    %1080 = vmatprep.subr.mxu0 0.0
    %1081 = vmatpush2.msra.mxu0 0.0
    %1082 = vmatprep.subr.mxu0 0.0
    %1083 = vmatpush2.msra.mxu0 0.0
    %1084 = vmatprep.subr.mxu0 0.0
    %1085 = vmatpush2.msra.mxu0 0.0
    %1086 = vmatprep.mubr.f32.mxu0 0.0
    %1087 = vmatmul.mubr.f32.gmra.mxu0 %v1013
    %v1088 = vpop.f32.mrf.mxu0
    %v1089 = vadd.f32 0.0, %v1088
    %v1090 = vpop.f32.mrf.mxu0
    %1091 = vmatprep.mubr.f32.mxu0 0.0
    %1092 = vmatmul.mubr.f32.gmra.mxu0 %v1016
    %v1093 = vpop.f32.mrf.mxu0
    %v1094 = vadd.f32 0.0, %v1093
    %v1095 = vpop.f32.mrf.mxu0
    %1096 = vdwg.mxu0
    %v1097 = vmul.f32 %v819, %v1003
    %v1098 = vmul.f32 %v824, %v1008
    %v1099 = vmul.f32 %v1097, %v1089
    %v1100 = vmul.f32 %v1098, %v1094
    %v1102 = vsel %vm671, %v67, 0
    %1104 = vmatprep.subr.mxu0 0.0
    %1105 = vmatpush1.msra.mxu0 0.0
    %1106 = vmatprep.subr.mxu0 0.0
    %1107 = vmatpush1.msra.mxu0 0.0
    %1108 = vmatprep.subr.mxu0 0.0
    %1109 = vmatpush1.msra.mxu0 0.0
    %1110 = vmatprep.subr.mxu0 0.0
    %1111 = vmatpush1.msra.mxu0 0.0
    %1112 = vmatprep.subr.mxu0 0.0
    %1113 = vmatpush1.msra.mxu0 0.0
    %1114 = vmatprep.subr.mxu0 0.0
    %1115 = vmatpush1.msra.mxu0 0.0
    %1116 = vmatprep.subr.mxu0 0.0
    %1117 = vmatpush1.msra.mxu0 0.0
    %1118 = vmatprep.subr.mxu0 0.0
    %1119 = vmatpush1.msra.mxu0 0.0
    %1120 = vmatprep.subr.mxu0 0.0
    %1121 = vmatpush1.msra.mxu0 0.0
    %1122 = vmatprep.subr.mxu0 0.0
    %1123 = vmatpush1.msra.mxu0 0.0
    %1124 = vmatprep.subr.mxu0 0.0
    %1125 = vmatpush1.msra.mxu0 0.0
    %1126 = vmatprep.subr.mxu0 0.0
    %1127 = vmatpush1.msra.mxu0 0.0
    %1128 = vmatprep.subr.mxu0 0.0
    %1129 = vmatpush1.msra.mxu0 0.0
    %1130 = vmatprep.subr.mxu0 0.0
    %1131 = vmatpush1.msra.mxu0 0.0
    %1132 = vmatprep.subr.mxu0 0.0
    %1133 = vmatpush1.msra.mxu0 %v1100
    %1134 = vmatprep.subr.mxu0 0.0
    %1135 = vmatpush1.msra.mxu0 %v1099
    %1136 = vmatprep.subr.mxu0 0.0
    %1137 = vmatpush2.msra.mxu0 0.0
    %1138 = vmatprep.subr.mxu0 0.0
    %1139 = vmatpush2.msra.mxu0 0.0
    %1140 = vmatprep.subr.mxu0 0.0
    %1141 = vmatpush2.msra.mxu0 0.0
    %1142 = vmatprep.subr.mxu0 0.0
    %1143 = vmatpush2.msra.mxu0 0.0
    %1144 = vmatprep.subr.mxu0 0.0
    %1145 = vmatpush2.msra.mxu0 0.0
    %1146 = vmatprep.subr.mxu0 0.0
    %1147 = vmatpush2.msra.mxu0 0.0
    %1148 = vmatprep.subr.mxu0 0.0
    %1149 = vmatpush2.msra.mxu0 0.0
    %1150 = vmatprep.subr.mxu0 0.0
    %1151 = vmatpush2.msra.mxu0 0.0
    %1152 = vmatprep.subr.mxu0 0.0
    %1153 = vmatpush2.msra.mxu0 0.0
    %1154 = vmatprep.subr.mxu0 0.0
    %1155 = vmatpush2.msra.mxu0 0.0
    %1156 = vmatprep.subr.mxu0 0.0
    %1157 = vmatpush2.msra.mxu0 0.0
    %1158 = vmatprep.subr.mxu0 0.0
    %1159 = vmatpush2.msra.mxu0 0.0
    %1160 = vmatprep.subr.mxu0 0.0
    %1161 = vmatpush2.msra.mxu0 0.0
    %1162 = vmatprep.subr.mxu0 0.0
    %1163 = vmatpush2.msra.mxu0 0.0
    %1164 = vmatprep.subr.mxu0 0.0
    %1165 = vmatpush2.msra.mxu0 0.0
    %1166 = vmatprep.subr.mxu0 0.0
    %1167 = vmatpush2.msra.mxu0 0.0
    %1168 = vmatprep.mubr.f32.mxu0 0.0
    %1169 = vmatmul.mubr.f32.gmra.mxu0 %v1102
    %v1170 = vpop.f32.mrf.mxu0
    %v1171 = vadd.f32 0.0, %v1170
    %v1172 = vpop.f32.mrf.mxu0
    %1173 = vdwg.mxu0
    %v1174 = vmul.f32 %v1171, 0.5
    %1176 = vrot.lane.b32.xlu0 %v742, 112
    %v1177 = vpop.permute.xlu0 %1176
    %v1180 = vsel %vm671, %v1174, 0
    %1182 = vmatprep.subr.mxu0 0.0
    %1183 = vmatpush1.msra.mxu0 0.0
    %1184 = vmatprep.subr.mxu0 0.0
    %1185 = vmatpush1.msra.mxu0 0.0
    %1186 = vmatprep.subr.mxu0 0.0
    %1187 = vmatpush1.msra.mxu0 0.0
    %1188 = vmatprep.subr.mxu0 0.0
    %1189 = vmatpush1.msra.mxu0 0.0
    %1190 = vmatprep.subr.mxu0 0.0
    %1191 = vmatpush1.msra.mxu0 0.0
    %1192 = vmatprep.subr.mxu0 0.0
    %1193 = vmatpush1.msra.mxu0 0.0
    %1194 = vmatprep.subr.mxu0 0.0
    %1195 = vmatpush1.msra.mxu0 0.0
    %1196 = vmatprep.subr.mxu0 0.0
    %1197 = vmatpush1.msra.mxu0 0.0
    %1198 = vmatprep.subr.mxu0 0.0
    %1199 = vmatpush1.msra.mxu0 0.0
    %1200 = vmatprep.subr.mxu0 0.0
    %1201 = vmatpush1.msra.mxu0 0.0
    %1202 = vmatprep.subr.mxu0 0.0
    %1203 = vmatpush1.msra.mxu0 0.0
    %1204 = vmatprep.subr.mxu0 0.0
    %1205 = vmatpush1.msra.mxu0 0.0
    %1206 = vmatprep.subr.mxu0 0.0
    %1207 = vmatpush1.msra.mxu0 0.0
    %1208 = vmatprep.subr.mxu0 0.0
    %1209 = vmatpush1.msra.mxu0 0.0
    %1210 = vmatprep.subr.mxu0 0.0
    %1211 = vmatpush1.msra.mxu0 %v47
    %1212 = vmatprep.subr.mxu0 0.0
    %1213 = vmatpush1.msra.mxu0 %v46
    %1214 = vmatprep.subr.mxu0 0.0
    %1215 = vmatpush2.msra.mxu0 0.0
    %1216 = vmatprep.subr.mxu0 0.0
    %1217 = vmatpush2.msra.mxu0 0.0
    %1218 = vmatprep.subr.mxu0 0.0
    %1219 = vmatpush2.msra.mxu0 0.0
    %1220 = vmatprep.subr.mxu0 0.0
    %1221 = vmatpush2.msra.mxu0 0.0
    %1222 = vmatprep.subr.mxu0 0.0
    %1223 = vmatpush2.msra.mxu0 0.0
    %1224 = vmatprep.subr.mxu0 0.0
    %1225 = vmatpush2.msra.mxu0 0.0
    %1226 = vmatprep.subr.mxu0 0.0
    %1227 = vmatpush2.msra.mxu0 0.0
    %1228 = vmatprep.subr.mxu0 0.0
    %1229 = vmatpush2.msra.mxu0 0.0
    %1230 = vmatprep.subr.mxu0 0.0
    %1231 = vmatpush2.msra.mxu0 0.0
    %1232 = vmatprep.subr.mxu0 0.0
    %1233 = vmatpush2.msra.mxu0 0.0
    %1234 = vmatprep.subr.mxu0 0.0
    %1235 = vmatpush2.msra.mxu0 0.0
    %1236 = vmatprep.subr.mxu0 0.0
    %1237 = vmatpush2.msra.mxu0 0.0
    %1238 = vmatprep.subr.mxu0 0.0
    %1239 = vmatpush2.msra.mxu0 0.0
    %1240 = vmatprep.subr.mxu0 0.0
    %1241 = vmatpush2.msra.mxu0 0.0
    %1242 = vmatprep.subr.mxu0 0.0
    %1243 = vmatpush2.msra.mxu0 0.0
    %1244 = vmatprep.subr.mxu0 0.0
    %1245 = vmatpush2.msra.mxu0 0.0
    %1246 = vmatprep.mubr.f32.mxu0 0.0
    %1247 = vmatmul.mubr.f32.gmra.mxu0 %v1180
    %v1248 = vpop.f32.mrf.mxu0
    %v1249 = vadd.f32 %v1177, %v1248
    %v1250 = vpop.f32.mrf.mxu0
    %1251 = vdwg.mxu0
    %v1252 = vand.u32 2147483647, %v1249
    %v1253 = vsub.f32 0.0, %v1252
    %v1254 = vmul.f32 %v1253, 1.442695
    %v1255 = vpow.pop %v1254
    %vm1256 = vcmp.ge.f32.partialorder %v1249, 0.0
    %v1257 = vadd.f32 %v1255, 1.0
    %v1258 = vrcp.pop %v1257
    %v1259 = vmul.f32 1.0, %v1258
    %v1260 = vmul.f32 %v1255, %v1258
    %v1261 = vsel %vm1256, %v1259, %v1260
    %v1262 = vmul.f32 %v1249, %v1261
    %v1263 = vadd.f32 %v668, %v1262
    %v1265 = vsel %vm671, %v1263, 0
    %1267 = vmatprep.subr.mxu0 0.0
    %1268 = vmatpush1.msra.mxu0 0.0
    %1269 = vmatprep.subr.mxu0 0.0
    %1270 = vmatpush1.msra.mxu0 0.0
    %1271 = vmatprep.subr.mxu0 0.0
    %1272 = vmatpush1.msra.mxu0 0.0
    %1273 = vmatprep.subr.mxu0 0.0
    %1274 = vmatpush1.msra.mxu0 0.0
    %1275 = vmatprep.subr.mxu0 0.0
    %1276 = vmatpush1.msra.mxu0 0.0
    %1277 = vmatprep.subr.mxu0 0.0
    %1278 = vmatpush1.msra.mxu0 0.0
    %1279 = vmatprep.subr.mxu0 0.0
    %1280 = vmatpush1.msra.mxu0 0.0
    %1281 = vmatprep.subr.mxu0 0.0
    %1282 = vmatpush1.msra.mxu0 0.0
    %1283 = vmatprep.subr.mxu0 0.0
    %1284 = vmatpush1.msra.mxu0 0.0
    %1285 = vmatprep.subr.mxu0 0.0
    %1286 = vmatpush1.msra.mxu0 0.0
    %1287 = vmatprep.subr.mxu0 0.0
    %1288 = vmatpush1.msra.mxu0 0.0
    %1289 = vmatprep.subr.mxu0 0.0
    %1290 = vmatpush1.msra.mxu0 0.0
    %1291 = vmatprep.subr.mxu0 0.0
    %1292 = vmatpush1.msra.mxu0 0.0
    %1293 = vmatprep.subr.mxu0 0.0
    %1294 = vmatpush1.msra.mxu0 0.0
    %1295 = vmatprep.subr.mxu0 0.0
    %1296 = vmatpush1.msra.mxu0 %v50
    %1297 = vmatprep.subr.mxu0 0.0
    %1298 = vmatpush1.msra.mxu0 %v49
    %1299 = vmatprep.subr.mxu0 0.0
    %1300 = vmatpush2.msra.mxu0 0.0
    %1301 = vmatprep.subr.mxu0 0.0
    %1302 = vmatpush2.msra.mxu0 0.0
    %1303 = vmatprep.subr.mxu0 0.0
    %1304 = vmatpush2.msra.mxu0 0.0
    %1305 = vmatprep.subr.mxu0 0.0
    %1306 = vmatpush2.msra.mxu0 0.0
    %1307 = vmatprep.subr.mxu0 0.0
    %1308 = vmatpush2.msra.mxu0 0.0
    %1309 = vmatprep.subr.mxu0 0.0
    %1310 = vmatpush2.msra.mxu0 0.0
    %1311 = vmatprep.subr.mxu0 0.0
    %1312 = vmatpush2.msra.mxu0 0.0
    %1313 = vmatprep.subr.mxu0 0.0
    %1314 = vmatpush2.msra.mxu0 0.0
    %1315 = vmatprep.subr.mxu0 0.0
    %1316 = vmatpush2.msra.mxu0 0.0
    %1317 = vmatprep.subr.mxu0 0.0
    %1318 = vmatpush2.msra.mxu0 0.0
    %1319 = vmatprep.subr.mxu0 0.0
    %1320 = vmatpush2.msra.mxu0 0.0
    %1321 = vmatprep.subr.mxu0 0.0
    %1322 = vmatpush2.msra.mxu0 0.0
    %1323 = vmatprep.subr.mxu0 0.0
    %1324 = vmatpush2.msra.mxu0 0.0
    %1325 = vmatprep.subr.mxu0 0.0
    %1326 = vmatpush2.msra.mxu0 0.0
    %1327 = vmatprep.subr.mxu0 0.0
    %1328 = vmatpush2.msra.mxu0 0.0
    %1329 = vmatprep.subr.mxu0 0.0
    %1330 = vmatpush2.msra.mxu0 0.0
    %1331 = vmatprep.mubr.f32.mxu0 0.0
    %1332 = vmatmul.mubr.f32.gmra.mxu0 %v1265
    %v1333 = vpop.f32.mrf.mxu0
    %v1334 = vadd.f32 0.0, %v1333
    %v1335 = vpop.f32.mrf.mxu0
    %1336 = vdwg.mxu0
    %1337 = vmatprep.subr.mxu0 0.0
    %1338 = vmatpush1.msra.mxu0 0.0
    %1339 = vmatprep.subr.mxu0 0.0
    %1340 = vmatpush1.msra.mxu0 0.0
    %1341 = vmatprep.subr.mxu0 0.0
    %1342 = vmatpush1.msra.mxu0 0.0
    %1343 = vmatprep.subr.mxu0 0.0
    %1344 = vmatpush1.msra.mxu0 0.0
    %1345 = vmatprep.subr.mxu0 0.0
    %1346 = vmatpush1.msra.mxu0 0.0
    %1347 = vmatprep.subr.mxu0 0.0
    %1348 = vmatpush1.msra.mxu0 0.0
    %1349 = vmatprep.subr.mxu0 0.0
    %1350 = vmatpush1.msra.mxu0 0.0
    %1351 = vmatprep.subr.mxu0 0.0
    %1352 = vmatpush1.msra.mxu0 0.0
    %1353 = vmatprep.subr.mxu0 0.0
    %1354 = vmatpush1.msra.mxu0 0.0
    %1355 = vmatprep.subr.mxu0 0.0
    %1356 = vmatpush1.msra.mxu0 0.0
    %1357 = vmatprep.subr.mxu0 0.0
    %1358 = vmatpush1.msra.mxu0 0.0
    %1359 = vmatprep.subr.mxu0 0.0
    %1360 = vmatpush1.msra.mxu0 0.0
    %1361 = vmatprep.subr.mxu0 0.0
    %1362 = vmatpush1.msra.mxu0 0.0
    %1363 = vmatprep.subr.mxu0 0.0
    %1364 = vmatpush1.msra.mxu0 0.0
    %1365 = vmatprep.subr.mxu0 0.0
    %1366 = vmatpush1.msra.mxu0 0.0
    %1367 = vmatprep.subr.mxu0 0.0
    %1368 = vmatpush1.msra.mxu0 %v1334
    %1369 = vmatprep.subr.mxu0 0.0
    %1370 = vmatpush2.msra.mxu0 0.0
    %1371 = vmatprep.subr.mxu0 0.0
    %1372 = vmatpush2.msra.mxu0 0.0
    %1373 = vmatprep.subr.mxu0 0.0
    %1374 = vmatpush2.msra.mxu0 0.0
    %1375 = vmatprep.subr.mxu0 0.0
    %1376 = vmatpush2.msra.mxu0 0.0
    %1377 = vmatprep.subr.mxu0 0.0
    %1378 = vmatpush2.msra.mxu0 0.0
    %1379 = vmatprep.subr.mxu0 0.0
    %1380 = vmatpush2.msra.mxu0 0.0
    %1381 = vmatprep.subr.mxu0 0.0
    %1382 = vmatpush2.msra.mxu0 0.0
    %1383 = vmatprep.subr.mxu0 0.0
    %1384 = vmatpush2.msra.mxu0 0.0
    %1385 = vmatprep.subr.mxu0 0.0
    %1386 = vmatpush2.msra.mxu0 0.0
    %1387 = vmatprep.subr.mxu0 0.0
    %1388 = vmatpush2.msra.mxu0 0.0
    %1389 = vmatprep.subr.mxu0 0.0
    %1390 = vmatpush2.msra.mxu0 0.0
    %1391 = vmatprep.subr.mxu0 0.0
    %1392 = vmatpush2.msra.mxu0 0.0
    %1393 = vmatprep.subr.mxu0 0.0
    %1394 = vmatpush2.msra.mxu0 0.0
    %1395 = vmatprep.subr.mxu0 0.0
    %1396 = vmatpush2.msra.mxu0 0.0
    %1397 = vmatprep.subr.mxu0 0.0
    %1398 = vmatpush2.msra.mxu0 0.0
    %1399 = vmatprep.subr.mxu0 0.0
    %1400 = vmatpush2.msra.mxu0 0.0
    %1401 = vmatprep.mubr.f32.mxu0 0.0
    %1402 = vmatmul.mubr.f32.gmra.mxu0 %v747
    %v1403 = vpop.f32.mrf.mxu0
    %v1404 = vadd.f32 0.0, %v1403
    %v1405 = vpop.f32.mrf.mxu0
    %1406 = vmatprep.mubr.f32.mxu0 0.0
    %1407 = vmatmul.mubr.f32.gmra.mxu0 %v750
    %v1408 = vpop.f32.mrf.mxu0
    %v1409 = vadd.f32 0.0, %v1408
    %v1410 = vpop.f32.mrf.mxu0
    %1411 = vdwg.mxu0
    %1412 = vmatprep.subr.mxu0 0.0
    %1413 = vmatpush1.msra.mxu0 0.0
    %1414 = vmatprep.subr.mxu0 0.0
    %1415 = vmatpush1.msra.mxu0 0.0
    %1416 = vmatprep.subr.mxu0 0.0
    %1417 = vmatpush1.msra.mxu0 0.0
    %1418 = vmatprep.subr.mxu0 0.0
    %1419 = vmatpush1.msra.mxu0 0.0
    %1420 = vmatprep.subr.mxu0 0.0
    %1421 = vmatpush1.msra.mxu0 0.0
    %1422 = vmatprep.subr.mxu0 0.0
    %1423 = vmatpush1.msra.mxu0 0.0
    %1424 = vmatprep.subr.mxu0 0.0
    %1425 = vmatpush1.msra.mxu0 0.0
    %1426 = vmatprep.subr.mxu0 0.0
    %1427 = vmatpush1.msra.mxu0 0.0
    %1428 = vmatprep.subr.mxu0 0.0
    %1429 = vmatpush1.msra.mxu0 0.0
    %1430 = vmatprep.subr.mxu0 0.0
    %1431 = vmatpush1.msra.mxu0 0.0
    %1432 = vmatprep.subr.mxu0 0.0
    %1433 = vmatpush1.msra.mxu0 0.0
    %1434 = vmatprep.subr.mxu0 0.0
    %1435 = vmatpush1.msra.mxu0 0.0
    %1436 = vmatprep.subr.mxu0 0.0
    %1437 = vmatpush1.msra.mxu0 0.0
    %1438 = vmatprep.subr.mxu0 0.0
    %1439 = vmatpush1.msra.mxu0 0.0
    %1440 = vmatprep.subr.mxu0 0.0
    %1441 = vmatpush1.msra.mxu0 0.0
    %1442 = vmatprep.subr.mxu0 0.0
    %1443 = vmatpush1.msra.mxu0 %v52
    %1444 = vmatprep.subr.mxu0 0.0
    %1445 = vmatpush2.msra.mxu0 0.0
    %1446 = vmatprep.subr.mxu0 0.0
    %1447 = vmatpush2.msra.mxu0 0.0
    %1448 = vmatprep.subr.mxu0 0.0
    %1449 = vmatpush2.msra.mxu0 0.0
    %1450 = vmatprep.subr.mxu0 0.0
    %1451 = vmatpush2.msra.mxu0 0.0
    %1452 = vmatprep.subr.mxu0 0.0
    %1453 = vmatpush2.msra.mxu0 0.0
    %1454 = vmatprep.subr.mxu0 0.0
    %1455 = vmatpush2.msra.mxu0 0.0
    %1456 = vmatprep.subr.mxu0 0.0
    %1457 = vmatpush2.msra.mxu0 0.0
    %1458 = vmatprep.subr.mxu0 0.0
    %1459 = vmatpush2.msra.mxu0 0.0
    %1460 = vmatprep.subr.mxu0 0.0
    %1461 = vmatpush2.msra.mxu0 0.0
    %1462 = vmatprep.subr.mxu0 0.0
    %1463 = vmatpush2.msra.mxu0 0.0
    %1464 = vmatprep.subr.mxu0 0.0
    %1465 = vmatpush2.msra.mxu0 0.0
    %1466 = vmatprep.subr.mxu0 0.0
    %1467 = vmatpush2.msra.mxu0 0.0
    %1468 = vmatprep.subr.mxu0 0.0
    %1469 = vmatpush2.msra.mxu0 0.0
    %1470 = vmatprep.subr.mxu0 0.0
    %1471 = vmatpush2.msra.mxu0 0.0
    %1472 = vmatprep.subr.mxu0 0.0
    %1473 = vmatpush2.msra.mxu0 0.0
    %1474 = vmatprep.subr.mxu0 0.0
    %1475 = vmatpush2.msra.mxu0 0.0
    %1476 = vmatprep.mubr.f32.mxu0 0.0
    %1477 = vmatmul.mubr.f32.gmra.mxu0 %v828
    %v1478 = vpop.f32.mrf.mxu0
    %v1479 = vadd.f32 0.0, %v1478
    %v1480 = vpop.f32.mrf.mxu0
    %1481 = vmatprep.mubr.f32.mxu0 0.0
    %1482 = vmatmul.mubr.f32.gmra.mxu0 %v831
    %v1483 = vpop.f32.mrf.mxu0
    %v1484 = vadd.f32 0.0, %v1483
    %v1485 = vpop.f32.mrf.mxu0
    %1486 = vdwg.mxu0
    %v1487 = vand.u32 2147483647, %v1479
    %v1488 = vand.u32 2147483647, %v1484
    %v1489 = vsub.f32 0.0, %v1487
    %v1490 = vsub.f32 0.0, %v1488
    %v1491 = vmul.f32 %v1489, 1.442695
    %v1492 = vpow.pop %v1491
    %v1493 = vmul.f32 %v1490, 1.442695
    %v1494 = vpow.pop %v1493
    %vm1495 = vcmp.ge.f32.partialorder %v1479, 0.0
    %vm1496 = vcmp.ge.f32.partialorder %v1484, 0.0
    %v1497 = vadd.f32 %v1492, 1.0
    %v1498 = vadd.f32 %v1494, 1.0
    %v1499 = vrcp.pop %v1497
    %v1500 = vmul.f32 1.0, %v1499
    %v1501 = vrcp.pop %v1498
    %v1502 = vmul.f32 1.0, %v1501
    %v1503 = vmul.f32 %v1492, %v1499
    %v1504 = vmul.f32 %v1494, %v1501
    %v1505 = vsel %vm1495, %v1500, %v1503
    %v1506 = vsel %vm1496, %v1502, %v1504
    %v1507 = vmul.f32 %v1479, %v1505
    %v1508 = vmul.f32 %v1484, %v1506
    %v1510 = vsel %vm671, %v1507, 0
    %v1513 = vsel %vm671, %v1508, 0
    %1515 = vmatprep.subr.mxu0 0.0
    %1516 = vmatpush1.msra.mxu0 0.0
    %1517 = vmatprep.subr.mxu0 0.0
    %1518 = vmatpush1.msra.mxu0 0.0
    %1519 = vmatprep.subr.mxu0 0.0
    %1520 = vmatpush1.msra.mxu0 0.0
    %1521 = vmatprep.subr.mxu0 0.0
    %1522 = vmatpush1.msra.mxu0 0.0
    %1523 = vmatprep.subr.mxu0 0.0
    %1524 = vmatpush1.msra.mxu0 0.0
    %1525 = vmatprep.subr.mxu0 0.0
    %1526 = vmatpush1.msra.mxu0 0.0
    %1527 = vmatprep.subr.mxu0 0.0
    %1528 = vmatpush1.msra.mxu0 0.0
    %1529 = vmatprep.subr.mxu0 0.0
    %1530 = vmatpush1.msra.mxu0 0.0
    %1531 = vmatprep.subr.mxu0 0.0
    %1532 = vmatpush1.msra.mxu0 0.0
    %1533 = vmatprep.subr.mxu0 0.0
    %1534 = vmatpush1.msra.mxu0 0.0
    %1535 = vmatprep.subr.mxu0 0.0
    %1536 = vmatpush1.msra.mxu0 0.0
    %1537 = vmatprep.subr.mxu0 0.0
    %1538 = vmatpush1.msra.mxu0 0.0
    %1539 = vmatprep.subr.mxu0 0.0
    %1540 = vmatpush1.msra.mxu0 0.0
    %1541 = vmatprep.subr.mxu0 0.0
    %1542 = vmatpush1.msra.mxu0 0.0
    %1543 = vmatprep.subr.mxu0 0.0
    %1544 = vmatpush1.msra.mxu0 %v55
    %1545 = vmatprep.subr.mxu0 0.0
    %1546 = vmatpush1.msra.mxu0 %v54
    %1547 = vmatprep.subr.mxu0 0.0
    %1548 = vmatpush2.msra.mxu0 0.0
    %1549 = vmatprep.subr.mxu0 0.0
    %1550 = vmatpush2.msra.mxu0 0.0
    %1551 = vmatprep.subr.mxu0 0.0
    %1552 = vmatpush2.msra.mxu0 0.0
    %1553 = vmatprep.subr.mxu0 0.0
    %1554 = vmatpush2.msra.mxu0 0.0
    %1555 = vmatprep.subr.mxu0 0.0
    %1556 = vmatpush2.msra.mxu0 0.0
    %1557 = vmatprep.subr.mxu0 0.0
    %1558 = vmatpush2.msra.mxu0 0.0
    %1559 = vmatprep.subr.mxu0 0.0
    %1560 = vmatpush2.msra.mxu0 0.0
    %1561 = vmatprep.subr.mxu0 0.0
    %1562 = vmatpush2.msra.mxu0 0.0
    %1563 = vmatprep.subr.mxu0 0.0
    %1564 = vmatpush2.msra.mxu0 0.0
    %1565 = vmatprep.subr.mxu0 0.0
    %1566 = vmatpush2.msra.mxu0 0.0
    %1567 = vmatprep.subr.mxu0 0.0
    %1568 = vmatpush2.msra.mxu0 0.0
    %1569 = vmatprep.subr.mxu0 0.0
    %1570 = vmatpush2.msra.mxu0 0.0
    %1571 = vmatprep.subr.mxu0 0.0
    %1572 = vmatpush2.msra.mxu0 0.0
    %1573 = vmatprep.subr.mxu0 0.0
    %1574 = vmatpush2.msra.mxu0 0.0
    %1575 = vmatprep.subr.mxu0 0.0
    %1576 = vmatpush2.msra.mxu0 0.0
    %1577 = vmatprep.subr.mxu0 0.0
    %1578 = vmatpush2.msra.mxu0 0.0
    %1579 = vmatprep.mubr.f32.mxu0 0.0
    %1580 = vmatmul.mubr.f32.gmra.mxu0 %v1510
    %v1581 = vpop.f32.mrf.mxu0
    %v1582 = vadd.f32 0.0, %v1581
    %v1583 = vpop.f32.mrf.mxu0
    %1584 = vmatprep.mubr.f32.mxu0 0.0
    %1585 = vmatmul.mubr.f32.gmra.mxu0 %v1513
    %v1586 = vpop.f32.mrf.mxu0
    %v1587 = vadd.f32 0.0, %v1586
    %v1588 = vpop.f32.mrf.mxu0
    %1589 = vdwg.mxu0
    %v1591 = vsel %vm1018, %v58, 0
    %1593 = vmatprep.subr.mxu0 0.0
    %1594 = vmatpush1.msra.mxu0 0.0
    %1595 = vmatprep.subr.mxu0 0.0
    %1596 = vmatpush1.msra.mxu0 0.0
    %1597 = vmatprep.subr.mxu0 0.0
    %1598 = vmatpush1.msra.mxu0 0.0
    %1599 = vmatprep.subr.mxu0 0.0
    %1600 = vmatpush1.msra.mxu0 0.0
    %1601 = vmatprep.subr.mxu0 0.0
    %1602 = vmatpush1.msra.mxu0 0.0
    %1603 = vmatprep.subr.mxu0 0.0
    %1604 = vmatpush1.msra.mxu0 0.0
    %1605 = vmatprep.subr.mxu0 0.0
    %1606 = vmatpush1.msra.mxu0 0.0
    %1607 = vmatprep.subr.mxu0 0.0
    %1608 = vmatpush1.msra.mxu0 0.0
    %1609 = vmatprep.subr.mxu0 0.0
    %1610 = vmatpush1.msra.mxu0 0.0
    %1611 = vmatprep.subr.mxu0 0.0
    %1612 = vmatpush1.msra.mxu0 0.0
    %1613 = vmatprep.subr.mxu0 0.0
    %1614 = vmatpush1.msra.mxu0 0.0
    %1615 = vmatprep.subr.mxu0 0.0
    %1616 = vmatpush1.msra.mxu0 0.0
    %1617 = vmatprep.subr.mxu0 0.0
    %1618 = vmatpush1.msra.mxu0 0.0
    %1619 = vmatprep.subr.mxu0 0.0
    %1620 = vmatpush1.msra.mxu0 0.0
    %1621 = vmatprep.subr.mxu0 0.0
    %1622 = vmatpush1.msra.mxu0 %v1591
    %1623 = vmatprep.subr.mxu0 0.0
    %1624 = vmatpush1.msra.mxu0 %v57
    %1625 = vmatprep.subr.mxu0 0.0
    %1626 = vmatpush2.msra.mxu0 0.0
    %1627 = vmatprep.subr.mxu0 0.0
    %1628 = vmatpush2.msra.mxu0 0.0
    %1629 = vmatprep.subr.mxu0 0.0
    %1630 = vmatpush2.msra.mxu0 0.0
    %1631 = vmatprep.subr.mxu0 0.0
    %1632 = vmatpush2.msra.mxu0 0.0
    %1633 = vmatprep.subr.mxu0 0.0
    %1634 = vmatpush2.msra.mxu0 0.0
    %1635 = vmatprep.subr.mxu0 0.0
    %1636 = vmatpush2.msra.mxu0 0.0
    %1637 = vmatprep.subr.mxu0 0.0
    %1638 = vmatpush2.msra.mxu0 0.0
    %1639 = vmatprep.subr.mxu0 0.0
    %1640 = vmatpush2.msra.mxu0 0.0
    %1641 = vmatprep.subr.mxu0 0.0
    %1642 = vmatpush2.msra.mxu0 0.0
    %1643 = vmatprep.subr.mxu0 0.0
    %1644 = vmatpush2.msra.mxu0 0.0
    %1645 = vmatprep.subr.mxu0 0.0
    %1646 = vmatpush2.msra.mxu0 0.0
    %1647 = vmatprep.subr.mxu0 0.0
    %1648 = vmatpush2.msra.mxu0 0.0
    %1649 = vmatprep.subr.mxu0 0.0
    %1650 = vmatpush2.msra.mxu0 0.0
    %1651 = vmatprep.subr.mxu0 0.0
    %1652 = vmatpush2.msra.mxu0 0.0
    %1653 = vmatprep.subr.mxu0 0.0
    %1654 = vmatpush2.msra.mxu0 0.0
    %1655 = vmatprep.subr.mxu0 0.0
    %1656 = vmatpush2.msra.mxu0 0.0
    %1657 = vmatprep.mubr.f32.mxu0 0.0
    %1658 = vmatmul.mubr.f32.gmra.mxu0 %v1013
    %v1659 = vpop.f32.mrf.mxu0
    %v1660 = vadd.f32 0.0, %v1659
    %v1661 = vpop.f32.mrf.mxu0
    %1662 = vmatprep.mubr.f32.mxu0 0.0
    %1663 = vmatmul.mubr.f32.gmra.mxu0 %v1016
    %v1664 = vpop.f32.mrf.mxu0
    %v1665 = vadd.f32 0.0, %v1664
    %v1666 = vpop.f32.mrf.mxu0
    %1667 = vdwg.mxu0
    %v1668 = vmul.f32 %v1404, %v1582
    %v1669 = vmul.f32 %v1409, %v1587
    %v1670 = vmul.f32 %v1668, %v1660
    %v1671 = vmul.f32 %v1669, %v1665
    %1672 = vmatprep.subr.mxu0 0.0
    %1673 = vmatpush1.msra.mxu0 0.0
    %1674 = vmatprep.subr.mxu0 0.0
    %1675 = vmatpush1.msra.mxu0 0.0
    %1676 = vmatprep.subr.mxu0 0.0
    %1677 = vmatpush1.msra.mxu0 0.0
    %1678 = vmatprep.subr.mxu0 0.0
    %1679 = vmatpush1.msra.mxu0 0.0
    %1680 = vmatprep.subr.mxu0 0.0
    %1681 = vmatpush1.msra.mxu0 0.0
    %1682 = vmatprep.subr.mxu0 0.0
    %1683 = vmatpush1.msra.mxu0 0.0
    %1684 = vmatprep.subr.mxu0 0.0
    %1685 = vmatpush1.msra.mxu0 0.0
    %1686 = vmatprep.subr.mxu0 0.0
    %1687 = vmatpush1.msra.mxu0 0.0
    %1688 = vmatprep.subr.mxu0 0.0
    %1689 = vmatpush1.msra.mxu0 0.0
    %1690 = vmatprep.subr.mxu0 0.0
    %1691 = vmatpush1.msra.mxu0 0.0
    %1692 = vmatprep.subr.mxu0 0.0
    %1693 = vmatpush1.msra.mxu0 0.0
    %1694 = vmatprep.subr.mxu0 0.0
    %1695 = vmatpush1.msra.mxu0 0.0
    %1696 = vmatprep.subr.mxu0 0.0
    %1697 = vmatpush1.msra.mxu0 0.0
    %1698 = vmatprep.subr.mxu0 0.0
    %1699 = vmatpush1.msra.mxu0 0.0
    %1700 = vmatprep.subr.mxu0 0.0
    %1701 = vmatpush1.msra.mxu0 %v1671
    %1702 = vmatprep.subr.mxu0 0.0
    %1703 = vmatpush1.msra.mxu0 %v1670
    %1704 = vmatprep.subr.mxu0 0.0
    %1705 = vmatpush2.msra.mxu0 0.0
    %1706 = vmatprep.subr.mxu0 0.0
    %1707 = vmatpush2.msra.mxu0 0.0
    %1708 = vmatprep.subr.mxu0 0.0
    %1709 = vmatpush2.msra.mxu0 0.0
    %1710 = vmatprep.subr.mxu0 0.0
    %1711 = vmatpush2.msra.mxu0 0.0
    %1712 = vmatprep.subr.mxu0 0.0
    %1713 = vmatpush2.msra.mxu0 0.0
    %1714 = vmatprep.subr.mxu0 0.0
    %1715 = vmatpush2.msra.mxu0 0.0
    %1716 = vmatprep.subr.mxu0 0.0
    %1717 = vmatpush2.msra.mxu0 0.0
    %1718 = vmatprep.subr.mxu0 0.0
    %1719 = vmatpush2.msra.mxu0 0.0
    %1720 = vmatprep.subr.mxu0 0.0
    %1721 = vmatpush2.msra.mxu0 0.0
    %1722 = vmatprep.subr.mxu0 0.0
    %1723 = vmatpush2.msra.mxu0 0.0
    %1724 = vmatprep.subr.mxu0 0.0
    %1725 = vmatpush2.msra.mxu0 0.0
    %1726 = vmatprep.subr.mxu0 0.0
    %1727 = vmatpush2.msra.mxu0 0.0
    %1728 = vmatprep.subr.mxu0 0.0
    %1729 = vmatpush2.msra.mxu0 0.0
    %1730 = vmatprep.subr.mxu0 0.0
    %1731 = vmatpush2.msra.mxu0 0.0
    %1732 = vmatprep.subr.mxu0 0.0
    %1733 = vmatpush2.msra.mxu0 0.0
    %1734 = vmatprep.subr.mxu0 0.0
    %1735 = vmatpush2.msra.mxu0 0.0
    %1736 = vmatprep.mubr.f32.mxu0 0.0
    %1737 = vmatmul.mubr.f32.gmra.mxu0 %v1102
    %v1738 = vpop.f32.mrf.mxu0
    %v1739 = vadd.f32 0.0, %v1738
    %v1740 = vpop.f32.mrf.mxu0
    %1741 = vdwg.mxu0
    %v1742 = vmul.f32 %v1739, 0.5
    %1744 = vrot.lane.b32.xlu0 %v1334, 112
    %v1745 = vpop.permute.xlu0 %1744
    %v1748 = vsel %vm671, %v1742, 0
    %1750 = vmatprep.subr.mxu0 0.0
    %1751 = vmatpush1.msra.mxu0 0.0
    %1752 = vmatprep.subr.mxu0 0.0
    %1753 = vmatpush1.msra.mxu0 0.0
    %1754 = vmatprep.subr.mxu0 0.0
    %1755 = vmatpush1.msra.mxu0 0.0
    %1756 = vmatprep.subr.mxu0 0.0
    %1757 = vmatpush1.msra.mxu0 0.0
    %1758 = vmatprep.subr.mxu0 0.0
    %1759 = vmatpush1.msra.mxu0 0.0
    %1760 = vmatprep.subr.mxu0 0.0
    %1761 = vmatpush1.msra.mxu0 0.0
    %1762 = vmatprep.subr.mxu0 0.0
    %1763 = vmatpush1.msra.mxu0 0.0
    %1764 = vmatprep.subr.mxu0 0.0
    %1765 = vmatpush1.msra.mxu0 0.0
    %1766 = vmatprep.subr.mxu0 0.0
    %1767 = vmatpush1.msra.mxu0 0.0
    %1768 = vmatprep.subr.mxu0 0.0
    %1769 = vmatpush1.msra.mxu0 0.0
    %1770 = vmatprep.subr.mxu0 0.0
    %1771 = vmatpush1.msra.mxu0 0.0
    %1772 = vmatprep.subr.mxu0 0.0
    %1773 = vmatpush1.msra.mxu0 0.0
    %1774 = vmatprep.subr.mxu0 0.0
    %1775 = vmatpush1.msra.mxu0 0.0
    %1776 = vmatprep.subr.mxu0 0.0
    %1777 = vmatpush1.msra.mxu0 0.0
    %1778 = vmatprep.subr.mxu0 0.0
    %1779 = vmatpush1.msra.mxu0 %v61
    %1780 = vmatprep.subr.mxu0 0.0
    %1781 = vmatpush1.msra.mxu0 %v60
    %1782 = vmatprep.subr.mxu0 0.0
    %1783 = vmatpush2.msra.mxu0 0.0
    %1784 = vmatprep.subr.mxu0 0.0
    %1785 = vmatpush2.msra.mxu0 0.0
    %1786 = vmatprep.subr.mxu0 0.0
    %1787 = vmatpush2.msra.mxu0 0.0
    %1788 = vmatprep.subr.mxu0 0.0
    %1789 = vmatpush2.msra.mxu0 0.0
    %1790 = vmatprep.subr.mxu0 0.0
    %1791 = vmatpush2.msra.mxu0 0.0
    %1792 = vmatprep.subr.mxu0 0.0
    %1793 = vmatpush2.msra.mxu0 0.0
    %1794 = vmatprep.subr.mxu0 0.0
    %1795 = vmatpush2.msra.mxu0 0.0
    %1796 = vmatprep.subr.mxu0 0.0
    %1797 = vmatpush2.msra.mxu0 0.0
    %1798 = vmatprep.subr.mxu0 0.0
    %1799 = vmatpush2.msra.mxu0 0.0
    %1800 = vmatprep.subr.mxu0 0.0
    %1801 = vmatpush2.msra.mxu0 0.0
    %1802 = vmatprep.subr.mxu0 0.0
    %1803 = vmatpush2.msra.mxu0 0.0
    %1804 = vmatprep.subr.mxu0 0.0
    %1805 = vmatpush2.msra.mxu0 0.0
    %1806 = vmatprep.subr.mxu0 0.0
    %1807 = vmatpush2.msra.mxu0 0.0
    %1808 = vmatprep.subr.mxu0 0.0
    %1809 = vmatpush2.msra.mxu0 0.0
    %1810 = vmatprep.subr.mxu0 0.0
    %1811 = vmatpush2.msra.mxu0 0.0
    %1812 = vmatprep.subr.mxu0 0.0
    %1813 = vmatpush2.msra.mxu0 0.0
    %1814 = vmatprep.mubr.f32.mxu0 0.0
    %1815 = vmatmul.mubr.f32.gmra.mxu0 %v1748
    %v1816 = vpop.f32.mrf.mxu0
    %v1817 = vadd.f32 %v1745, %v1816
    %v1818 = vpop.f32.mrf.mxu0
    %1819 = vdwg.mxu0
    %v1820 = vand.u32 2147483647, %v1817
    %v1821 = vsub.f32 0.0, %v1820
    %v1822 = vmul.f32 %v1821, 1.442695
    %v1823 = vpow.pop %v1822
    %vm1824 = vcmp.ge.f32.partialorder %v1817, 0.0
    %v1825 = vadd.f32 %v1823, 1.0
    %v1826 = vrcp.pop %v1825
    %v1827 = vmul.f32 1.0, %v1826
    %v1828 = vmul.f32 %v1823, %v1826
    %v1829 = vsel %vm1824, %v1827, %v1828
    %v1830 = vmul.f32 %v1817, %v1829
    %v1831 = vadd.f32 %v1263, %v1830
    %v1833 = vsel %vm671, %v1831, 0
    %1835 = vmatprep.subr.mxu0 0.0
    %1836 = vmatpush1.msra.mxu0 0.0
    %1837 = vmatprep.subr.mxu0 0.0
    %1838 = vmatpush1.msra.mxu0 0.0
    %1839 = vmatprep.subr.mxu0 0.0
    %1840 = vmatpush1.msra.mxu0 0.0
    %1841 = vmatprep.subr.mxu0 0.0
    %1842 = vmatpush1.msra.mxu0 0.0
    %1843 = vmatprep.subr.mxu0 0.0
    %1844 = vmatpush1.msra.mxu0 0.0
    %1845 = vmatprep.subr.mxu0 0.0
    %1846 = vmatpush1.msra.mxu0 0.0
    %1847 = vmatprep.subr.mxu0 0.0
    %1848 = vmatpush1.msra.mxu0 0.0
    %1849 = vmatprep.subr.mxu0 0.0
    %1850 = vmatpush1.msra.mxu0 0.0
    %1851 = vmatprep.subr.mxu0 0.0
    %1852 = vmatpush1.msra.mxu0 0.0
    %1853 = vmatprep.subr.mxu0 0.0
    %1854 = vmatpush1.msra.mxu0 0.0
    %1855 = vmatprep.subr.mxu0 0.0
    %1856 = vmatpush1.msra.mxu0 0.0
    %1857 = vmatprep.subr.mxu0 0.0
    %1858 = vmatpush1.msra.mxu0 0.0
    %1859 = vmatprep.subr.mxu0 0.0
    %1860 = vmatpush1.msra.mxu0 0.0
    %1861 = vmatprep.subr.mxu0 0.0
    %1862 = vmatpush1.msra.mxu0 0.0
    %1863 = vmatprep.subr.mxu0 0.0
    %1864 = vmatpush1.msra.mxu0 %v70
    %1865 = vmatprep.subr.mxu0 0.0
    %1866 = vmatpush1.msra.mxu0 %v69
    %1867 = vmatprep.subr.mxu0 0.0
    %1868 = vmatpush2.msra.mxu0 0.0
    %1869 = vmatprep.subr.mxu0 0.0
    %1870 = vmatpush2.msra.mxu0 0.0
    %1871 = vmatprep.subr.mxu0 0.0
    %1872 = vmatpush2.msra.mxu0 0.0
    %1873 = vmatprep.subr.mxu0 0.0
    %1874 = vmatpush2.msra.mxu0 0.0
    %1875 = vmatprep.subr.mxu0 0.0
    %1876 = vmatpush2.msra.mxu0 0.0
    %1877 = vmatprep.subr.mxu0 0.0
    %1878 = vmatpush2.msra.mxu0 0.0
    %1879 = vmatprep.subr.mxu0 0.0
    %1880 = vmatpush2.msra.mxu0 0.0
    %1881 = vmatprep.subr.mxu0 0.0
    %1882 = vmatpush2.msra.mxu0 0.0
    %1883 = vmatprep.subr.mxu0 0.0
    %1884 = vmatpush2.msra.mxu0 0.0
    %1885 = vmatprep.subr.mxu0 0.0
    %1886 = vmatpush2.msra.mxu0 0.0
    %1887 = vmatprep.subr.mxu0 0.0
    %1888 = vmatpush2.msra.mxu0 0.0
    %1889 = vmatprep.subr.mxu0 0.0
    %1890 = vmatpush2.msra.mxu0 0.0
    %1891 = vmatprep.subr.mxu0 0.0
    %1892 = vmatpush2.msra.mxu0 0.0
    %1893 = vmatprep.subr.mxu0 0.0
    %1894 = vmatpush2.msra.mxu0 0.0
    %1895 = vmatprep.subr.mxu0 0.0
    %1896 = vmatpush2.msra.mxu0 0.0
    %1897 = vmatprep.subr.mxu0 0.0
    %1898 = vmatpush2.msra.mxu0 0.0
    %1899 = vmatprep.mubr.f32.mxu0 0.0
    %1900 = vmatmul.mubr.f32.gmra.mxu0 %v1833
    %v1901 = vpop.f32.mrf.mxu0
    %v1902 = vadd.f32 0.0, %v1901
    %v1903 = vpop.f32.mrf.mxu0
    %1904 = vdwg.mxu0
    %vm1905 = vcmask 7168
    %v1906 = vsel %vm1905, %v1902, 0.0
    %v1907 = vrot.slane %v1906, 4
    %v1908 = vadd.f32 %v1906, %v1907
    %v1909 = vrot.slane %v1908, 2
    %v1910 = vadd.f32 %v1908, %v1909
    %v1911 = vrot.slane %v1910, 1
    %v1912 = vadd.f32 %v1910, %v1911
    %vm1913 = vcmask 0
    %1914 = vst.msk [vmem:[#allocation2] sm:$0x1] %vm1913, %v1912
    // Predicated region
    $region46: #{jvp__.1} parent=1 // pred_check
      _
    $region47: #{jvp__.1} parent=1 // pred_check_branch
      %1916 = sbr.rel (0) target = $region49
    $region48: #{jvp__.1} parent=1 // pred_region
      %s1918 = ssub.s32 16, 16
      %1919 = vsyncadd [#allocation3], %s1918
      %s1921 = sshll.u32 [#allocation2], 4
      %s1922 = int_to_ptr.vmem [resolvable:$true] %s1921
      %1924 = dma.vmem_to_hbm [thread:$0]  %s1922, 16, %s11, [#allocation3]
    $region49: #{jvp__.1} parent=1 // pred_fallthru
      _
    // Predicated region
    $region50: #{jvp__.1} parent=1 // pred_check
      _
    $region51: #{jvp__.1} parent=1 // pred_check_branch
      %1926 = sbr.rel (0) target = $region53
    $region52: #{jvp__.1} parent=1 // pred_region
      %1927 = dma.done [#allocation3], 16
    $region53: #{jvp__.1} parent=1 // pred_fallthru
      _
    %1928 = vsyncpa [#allocation3], 1

</llo_original>
